<compile_context>
chip_gen: v7x
topology: tpu7x:2x2x1
jax: 0.10.0
libtpu: 0.0.40
codegen_flags: <defaults>
</compile_context>

<pallas_src>
import functools
import math

import jax
import jax.numpy as jnp
import numpy as np
from jax.experimental import pallas as pl
from jax.experimental.pallas import tpu as pltpu

LANE = 128


def _round_up(x, m):
    return (x + m - 1) // m * m


# ---------------------------------------------------------------------------
# Pallas kernel: grid = (batch, query-tile)
# ---------------------------------------------------------------------------
def _attn_kernel(x_ref, w_ref, b_ref, o_ref, qkv_ref, *, tq, cqkp, cvp, c):
    qi = pl.program_id(1)

    # Fused QKV projection for the whole (L, C) slab — once per batch element.
    @pl.when(qi == 0)
    def _():
        x_lc = jnp.transpose(x_ref[0]).astype(jnp.bfloat16)            # (L, C) bf16
        qkv = jnp.dot(x_lc, w_ref[...],
                      preferred_element_type=jnp.float32) + b_ref[...]
        qkv_ref[...] = qkv.astype(jnp.bfloat16)                        # (L, 2Cqkp+Cvp)

    row0 = pl.multiple_of(qi * tq, tq)
    q = qkv_ref[pl.ds(row0, tq), :cqkp]                                # (tq, Cqkp)
    k = qkv_ref[:, cqkp:2 * cqkp]                                      # (L,  Cqkp)
    v = qkv_ref[:, 2 * cqkp:2 * cqkp + cvp]                            # (L,  Cvp), gamma-scaled

    # energy[i, j] = sum_c q[i, c] * k[j, c]  — contract last dims, no transposes.
    energy = jax.lax.dot_general(q, k, (((1,), (1,)), ((), ())),
                                 preferred_element_type=jnp.float32)   # (tq, L)
    m = jnp.max(energy, axis=-1, keepdims=True)
    p = jnp.exp(energy - m)
    l = jnp.sum(p, axis=-1, keepdims=True)

    # Normalize after the PV matmul (L/Cvp x less VPU work) with an exact reciprocal.
    out = jnp.dot(p.astype(jnp.bfloat16), v,
                  preferred_element_type=jnp.float32)                  # (tq, Cvp)
    out = out * pl.reciprocal(l, approx=False)

    # Back to channels-on-sublanes, drop channel padding, add the f32 residual.
    out_ct = jnp.transpose(out)[:c, :]                                 # (C, tq)
    o_ref[0] = out_ct + x_ref[0, :, pl.ds(row0, tq)]


# ---------------------------------------------------------------------------
# Wrapper: weight fusion / gamma folding + pallas_call (I/O stays (B, C, L))
# ---------------------------------------------------------------------------
def self_attention(x_nchw, params):
    B, C, H, W = x_nchw.shape
    L = H * W
    Cqk = params["wq"].shape[0]
    Cqkp = _round_up(Cqk, LANE)
    Cvp = _round_up(C, LANE)
    Nf = 2 * Cqkp + Cvp

    # Native (B, C, L) layout — a free reshape, no transpose/pad HBM passes.
    x_cl = x_nchw.reshape(B, C, L).astype(jnp.float32)

    gamma = params["gamma"].reshape(()).astype(jnp.float32)

    def w_seg(w, cols):           # (out, in) 1x1-conv weight -> (C, cols) f32, zero-padded
        wt = jnp.transpose(w.astype(jnp.float32))
        return jnp.pad(wt, ((0, 0), (0, cols - wt.shape[1])))

    def b_seg(b, cols):
        return jnp.pad(b.astype(jnp.float32), (0, cols - b.shape[0]))

    # Fused [ q | k | gamma*v ] weight/bias (gamma folded into the value branch).
    w_fused = jnp.concatenate(
        [w_seg(params["wq"], Cqkp), w_seg(params["wk"], Cqkp),
         w_seg(gamma * params["wv"], Cvp)], axis=1).astype(jnp.bfloat16)   # (C, Nf)
    b_fused = jnp.concatenate(
        [b_seg(params["bq"], Cqkp), b_seg(params["bk"], Cqkp),
         b_seg(gamma * params["bv"], Cvp)]).reshape(1, Nf)                 # (1, Nf) f32

    # Query tiling: bound per-step VMEM to O(tq * L) instead of O(L^2).
    if L % LANE == 0:
        tq = min(L, 512)
        while L % tq:
            tq -= LANE
    else:
        tq = L            # TODO(synk): pad/mask ragged L instead of a single tile
    n_q = L // tq

    kernel = functools.partial(_attn_kernel, tq=tq, cqkp=Cqkp, cvp=Cvp, c=C)

    flops = B * (2 * L * C * Nf            # fused qkv projection
                 + 2 * L * L * Cqkp        # energy
                 + 2 * L * L * Cvp)        # p @ v
    bytes_accessed = 2 * B * C * L * 4 + w_fused.size * 2 + b_fused.size * 4

    # VMEM budget: double-buffered x/out blocks + resident weights, QKV scratch,
    # plus per-tile temporaries (energy/p and projection intermediates).
    vmem_est = (2 * (C * L * 4 + C * tq * 4 + w_fused.size * 2 + b_fused.size * 4)
                + L * Nf * 2 + 3 * tq * L * 4 + 2 * tq * Nf * 4 + (4 << 20))
    vmem_limit = int(min(96 << 20, max(32 << 20, vmem_est)))

    out = pl.pallas_call(
        kernel,
        out_shape=jax.ShapeDtypeStruct((B, C, L), jnp.float32),
        grid=(B, n_q),
        in_specs=[
            pl.BlockSpec((1, C, L), lambda b, q: (b, 0, 0)),    # x slab (per batch)
            pl.BlockSpec((C, Nf), lambda b, q: (0, 0)),         # fused W (VMEM-resident)
            pl.BlockSpec((1, Nf), lambda b, q: (0, 0)),         # fused bias
        ],
        out_specs=pl.BlockSpec((1, C, tq), lambda b, q: (b, 0, q)),
        scratch_shapes=[pltpu.VMEM((L, Nf), jnp.bfloat16)],     # per-batch Q|K|gamma*V
        compiler_params=pltpu.CompilerParams(
            dimension_semantics=("parallel", "arbitrary"),
            vmem_limit_bytes=vmem_limit),
        cost_estimate=pl.CostEstimate(flops=flops,
                                      transcendentals=B * L * L,
                                      bytes_accessed=bytes_accessed),
    )(x_cl, w_fused, b_fused)

    return out.reshape(B, C, H, W)


# ---------------------------------------------------------------------------
# Pure-JAX reference (mirrors the PyTorch forward, all f32)
# ---------------------------------------------------------------------------
def self_attention_ref(x, p):
    B, C, H, W = x.shape
    L = H * W
    xf = x.reshape(B, C, L).astype(jnp.float32)
    q = jnp.einsum("oc,bcl->bol", p["wq"], xf) + p["bq"][None, :, None]
    k = jnp.einsum("oc,bcl->bol", p["wk"], xf) + p["bk"][None, :, None]
    v = jnp.einsum("oc,bcl->bol", p["wv"], xf) + p["bv"][None, :, None]
    energy = jnp.einsum("bci,bcj->bij", q, k)
    att = jax.nn.softmax(energy, axis=-1)
    out = jnp.einsum("bcj,bij->bci", v, att)
    return p["gamma"][0] * out.reshape(B, C, H, W) + x


# ---------------------------------------------------------------------------
# Deterministic params (PyTorch Conv2d(k=1) default init; weights stored (out, in))
# ---------------------------------------------------------------------------
def init_params(key, in_dim):
    ks = jax.random.split(key, 6)
    bound = 1.0 / math.sqrt(in_dim)     # fan_in = in_dim * 1 * 1

    def u(k, shape):
        return jax.random.uniform(k, shape, jnp.float32, -bound, bound)

    dq = in_dim // 8
    return {
        "wq": u(ks[0], (dq, in_dim)), "bq": u(ks[1], (dq,)),
        "wk": u(ks[2], (dq, in_dim)), "bk": u(ks[3], (dq,)),
        "wv": u(ks[4], (in_dim, in_dim)), "bv": u(ks[5], (in_dim,)),
        # torch initializes gamma to zeros; use a nonzero value here so the test
        # exercises the attention branch (forward semantics are unchanged).
        "gamma": jnp.full((1,), 0.5, jnp.float32),
    }


if __name__ == "__main__":
    key = jax.random.PRNGKey(0)
    kx, kp = jax.random.split(key)

    B, C, H, W = 2, 32, 16, 16          # C // 8 = 4 query/key channels, L = 256
    x = jax.random.normal(kx, (B, C, H, W), jnp.float32)
    params = init_params(kp, C)

    fwd = jax.jit(self_attention)
    out = fwd(x, params)
    jax.block_until_ready(out)

    ref = self_attention_ref(x, params)
    assert out.shape == (B, C, H, W), out.shape
    assert bool(jnp.all(jnp.isfinite(out)))
    np.testing.assert_allclose(np.asarray(out), np.asarray(ref),
                               rtol=2e-2, atol=2e-2)
    print("KERNEL_OK")
</pallas_src>

<mosaic_0001>
module attributes {stable_mosaic.version = 11 : i64} {
  func.func @_attn_kernel(%arg0: i32, %arg1: i32, %arg2: memref<1x32x256xf32, #tpu.memory_space<vmem>>, %arg3: memref<32x384xbf16, #tpu.memory_space<vmem>>, %arg4: memref<1x384xf32, #tpu.memory_space<vmem>>, %arg5: memref<1x32x256xf32, #tpu.memory_space<vmem>>, %arg6: memref<256x384xbf16, #tpu.memory_space<vmem>>) attributes {dimension_semantics = [#tpu.dimension_semantics<parallel>, #tpu.dimension_semantics<arbitrary>], iteration_bounds = array<i64: 2, 1>, scalar_prefetch = 0 : i64, scratch_operands = 1 : i64, tpu.core_type = #tpu.core_type<tc>, window_params = [{transform_indices = @transform_0, window_bounds = array<i64: 1, 32, 256>}, {pipeline_mode = #tpu.pipeline_mode<synchronous>, transform_indices = @transform_1, window_bounds = array<i64: 32, 384>}, {pipeline_mode = #tpu.pipeline_mode<synchronous>, transform_indices = @transform_2, window_bounds = array<i64: 1, 384>}, {transform_indices = @transform_3, window_bounds = array<i64: 1, 32, 256>}]} {
    %c0_i32 = arith.constant 0 : i32
    %0 = arith.cmpi eq, %arg1, %c0_i32 : i32
    %1 = arith.extui %0 : i1 to i32
    %c0_i32_0 = arith.constant 0 : i32
    %2 = arith.cmpi ne, %1, %c0_i32_0 : i32
    scf.if %2 {
      %c0_11 = arith.constant 0 : index
      %c0_12 = arith.constant 0 : index
      %c0_13 = arith.constant 0 : index
      %31 = vector.load %arg2[%c0_11, %c0_12, %c0_13] : memref<1x32x256xf32, #tpu.memory_space<vmem>>, vector<1x32x256xf32>
      %32 = vector.shape_cast %31 : vector<1x32x256xf32> to vector<32x256xf32>
      %33 = tpu.transpose %32, [1, 0] : vector<32x256xf32> -> vector<256x32xf32>
      %34 = arith.truncf %33 : vector<256x32xf32> to vector<256x32xbf16>
      %c0_14 = arith.constant 0 : index
      %c0_15 = arith.constant 0 : index
      %35 = vector.load %arg3[%c0_14, %c0_15] : memref<32x384xbf16, #tpu.memory_space<vmem>>, vector<32x384xbf16>
      %cst_16 = arith.constant dense<0.000000e+00> : vector<256x384xf32>
      %36 = tpu.matmul %34, %35, %cst_16 {dimension_numbers = #tpu.dot_dimension_numbers<[1], [0], [0], [1], [0, 0, 1, 1], [], []>} : vector<256x32xbf16>, vector<32x384xbf16>, vector<256x384xf32> -> vector<256x384xf32>
      %c0_17 = arith.constant 0 : index
      %c0_18 = arith.constant 0 : index
      %37 = vector.load %arg4[%c0_17, %c0_18] : memref<1x384xf32, #tpu.memory_space<vmem>>, vector<1x384xf32>
      %38 = vector.broadcast %37 : vector<1x384xf32> to vector<256x384xf32>
      %39 = arith.addf %36, %38 : vector<256x384xf32>
      %40 = arith.truncf %39 : vector<256x384xf32> to vector<256x384xbf16>
      %c0_19 = arith.constant 0 : index
      %c0_20 = arith.constant 0 : index
      %41 = vector.load %arg6[%c0_19, %c0_20] : memref<256x384xbf16, #tpu.memory_space<vmem>>, vector<256x384xbf16>
      tpu.vector_store %arg6[%c0_19, %c0_20], %40 {strides = array<i32>} : memref<256x384xbf16, #tpu.memory_space<vmem>>, vector<256x384xbf16>,
    } else {
    }
    %c256_i32 = arith.constant 256 : i32
    %3 = arith.muli %arg1, %c256_i32 : i32
    %4 = tpu.assume_multiple %3, 256 : i32
    %5 = arith.index_cast %4 : i32 to index
    %c0 = arith.constant 0 : index
    %6 = vector.load %arg6[%5, %c0] : memref<256x384xbf16, #tpu.memory_space<vmem>>, vector<256x128xbf16>
    %c0_1 = arith.constant 0 : index
    %c128 = arith.constant 128 : index
    %7 = vector.load %arg6[%c0_1, %c128] : memref<256x384xbf16, #tpu.memory_space<vmem>>, vector<256x128xbf16>
    %c0_2 = arith.constant 0 : index
    %c256 = arith.constant 256 : index
    %8 = vector.load %arg6[%c0_2, %c256] : memref<256x384xbf16, #tpu.memory_space<vmem>>, vector<256x128xbf16>
    %cst = arith.constant dense<0.000000e+00> : vector<256x256xf32>
    %9 = tpu.matmul %6, %7, %cst {dimension_numbers = #tpu.dot_dimension_numbers<[1], [1], [0], [0], [0, 0, 1, 0], [], []>} : vector<256x128xbf16>, vector<256x128xbf16>, vector<256x256xf32> -> vector<256x256xf32>
    %cst_3 = arith.constant dense<0xFF800000> : vector<256xf32>
    %10 = vector.multi_reduction <maximumf>, %9, %cst_3 [1] : vector<256x256xf32> to vector<256xf32>
    %11 = vector.shape_cast %10 : vector<256xf32> to vector<256x1xf32>
    %12 = vector.broadcast %11 : vector<256x1xf32> to vector<256x256xf32>
    %13 = arith.subf %9, %12 : vector<256x256xf32>
    %14 = math.exp %13 : vector<256x256xf32>
    %cst_4 = arith.constant dense<0.000000e+00> : vector<256xf32>
    %15 = vector.multi_reduction <add>, %14, %cst_4 [1] : vector<256x256xf32> to vector<256xf32>
    %16 = vector.shape_cast %15 : vector<256xf32> to vector<256x1xf32>
    %17 = arith.truncf %14 : vector<256x256xf32> to vector<256x256xbf16>
    %cst_5 = arith.constant dense<0.000000e+00> : vector<256x128xf32>
    %18 = tpu.matmul %17, %8, %cst_5 {dimension_numbers = #tpu.dot_dimension_numbers<[1], [0], [0], [1], [0, 0, 1, 1], [], []>} : vector<256x256xbf16>, vector<256x128xbf16>, vector<256x128xf32> -> vector<256x128xf32>
    %19 = tpu.reciprocal %16 : vector<256x1xf32> -> vector<256x1xf32>
    %20 = vector.broadcast %19 : vector<256x1xf32> to vector<256x128xf32>
    %21 = arith.mulf %18, %20 : vector<256x128xf32>
    %22 = tpu.transpose %21, [1, 0] : vector<256x128xf32> -> vector<128x256xf32>
    %23 = vector.extract_strided_slice %22 {offsets = [0, 0], sizes = [32, 256], strides = [1, 1]} : vector<128x256xf32> to vector<32x256xf32>
    %c0_6 = arith.constant 0 : index
    %c0_7 = arith.constant 0 : index
    %24 = arith.index_cast %4 : i32 to index
    %25 = vector.load %arg2[%c0_6, %c0_7, %24] : memref<1x32x256xf32, #tpu.memory_space<vmem>>, vector<1x32x256xf32>
    %26 = vector.shape_cast %25 : vector<1x32x256xf32> to vector<32x256xf32>
    %27 = arith.addf %23, %26 : vector<32x256xf32>
    %c0_8 = arith.constant 0 : index
    %c0_9 = arith.constant 0 : index
    %c0_10 = arith.constant 0 : index
    %28 = vector.load %arg5[%c0_8, %c0_9, %c0_10] : memref<1x32x256xf32, #tpu.memory_space<vmem>>, vector<1x32x256xf32>
    %29 = vector.shape_cast %28 : vector<1x32x256xf32> to vector<32x256xf32>
    %30 = vector.shape_cast %27 : vector<32x256xf32> to vector<1x32x256xf32>
    tpu.vector_store %arg5[%c0_8, %c0_9, %c0_10], %30 {strides = array<i32>} : memref<1x32x256xf32, #tpu.memory_space<vmem>>, vector<1x32x256xf32>,
    return
  }
  func.func @transform_0(%arg0: i32, %arg1: i32) -> (i32, i32, i32) {
    %c0_i32 = arith.constant 0 : i32
    %c0_i32_0 = arith.constant 0 : i32
    %c0_i32_1 = arith.constant 0 : i32
    return %arg0, %c0_i32, %c0_i32_0 : i32, i32, i32
  }
  func.func @transform_1(%arg0: i32, %arg1: i32) -> (i32, i32) {
    %c0_i32 = arith.constant 0 : i32
    %c0_i32_0 = arith.constant 0 : i32
    %c0_i32_1 = arith.constant 0 : i32
    return %c0_i32, %c0_i32_0 : i32, i32
  }
  func.func @transform_2(%arg0: i32, %arg1: i32) -> (i32, i32) {
    %c0_i32 = arith.constant 0 : i32
    %c0_i32_0 = arith.constant 0 : i32
    %c0_i32_1 = arith.constant 0 : i32
    return %c0_i32, %c0_i32_0 : i32, i32
  }
  func.func @transform_3(%arg0: i32, %arg1: i32) -> (i32, i32, i32) {
    %c0_i32 = arith.constant 0 : i32
    %c0_i32_0 = arith.constant 0 : i32
    return %arg0, %c0_i32, %arg1 : i32, i32, i32
  }
}

</mosaic_0001>

<llo_original>
// kernel: self_attention.1
$region0: #{self_attention.1}
  #allocation0 [shape = 'u32[]', space=smem, size = 0x4, offset = 0x4, fixed_abs, tag = 'smem constant byte address 0x4 - core index']
  #allocation1 [shape = 'u32[144,128]{1,0:T(1,128)}', space=vmem, size = 0x12000, scoped, tag = 'internal scratch']
  #allocation2 [shape = 'bf16[256,384]{1,0:T(16,128)(2,1)}', space=vmem, size = 0x30000, scoped, tag = 'scratch operand']
  %s0 = inlined_call_operand.vmem [shape: f32[2,32,256], index: 0, kind: input, shape index: {}]
  %s1 = inlined_call_operand.vmem [shape: bf16[32,384], index: 1, kind: input, shape index: {}]
  %s2 = inlined_call_operand.vmem [shape: f32[1,384], index: 2, kind: input, shape index: {}]
  %s3 = inlined_call_operand.vmem [shape: f32[2,32,256], index: 3, kind: output, shape index: {}]
  %s4 = sld [smem:[#allocation0]]
  $region49: #{self_attention.1} parent=0
    _
  %s6 = ssub.s32 1, %s4
  %s7 = scalar_select 0, %s6, %s4
  loop: start=0, step=1, limit=4
  $region2: #{self_attention.1} parent=0 // loop_pre_header
    _
  $region3: #{self_attention.1} parent=0 // loop_header
    %s9 = sphi 0, %s13
    %p10 = scmp.ge.s32.totalorder %s9, 4
    %s16 = sphi 0, %s28
    %s17 = sphi 0, %s24
    %s18 = sphi 0, %s16
    %s19 = sphi 0, %s17
    %s20 = sphi 0, %s18
    %s21 = sphi 0, %s19
    %s31 = sphi 0, %s33
    %s34 = sphi 0, %s31
    %s35 = sphi 0, %s34
    %s51 = sphi 0, %s35
    %s55 = sphi 0, %s55
    %s57 = sphi 0, %s55
    %s58 = sphi 0, %s57
    %s72 = sphi 0, %s58
    %s76 = sphi 0, %s76
    %s78 = sphi 0, %s76
    %s79 = sphi 0, %s78
    %s93 = sphi 0, %s79
    %s101 = sphi 0, %s103
    %s104 = sphi 0, %s101
    %s105 = sphi 0, %s104
    %s121 = sphi 0, %s105
  $region4: #{self_attention.1} parent=0 // loop_header_branch
    %12 = sbr.rel (%p10) target = $region8
  $region5: #{self_attention.1} parent=0 // loop_body
    %s14 = ssub.s32 %s9, 1
    %s15 = ssub.s32 %s9, 2
    %s22 = sadd.s32 1, %s17
    %p23 = scmp.ge.s32.totalorder %s22, 1
    %s24 = scalar_select %p23, 0, %s22
    %s25 = sadd.s32 1, %s16
    %s26 = scalar_select %p23, %s25, %s16
    %p27 = scmp.ge.s32.totalorder %s26, 2
    %s28 = scalar_select %p27, 0, %s26
    %s29 = ssub.s32 %s16, %s28
    %p30 = scmp.eq.s32.totalorder %s29, 0
    %s32 = sadd.s32 %s31, 1
    %s33 = scalar_select %p30, %s31, %s32
    %p36 = pneg %p30
    %p37 = scmp.eq.s32.totalorder %s9, 1
    %p38 = por %p36, %p37
    %p39 = scmp.ne.s32.totalorder %s31, %s34
    %p40 = scmp.eq.s32.totalorder %s9, 0
    %p41 = por %p39, %p40
    %p42 = scmp.ne.s32.totalorder %s31, %s34
    %p43 = scmp.eq.s32.totalorder %s14, 1
    %p44 = por %p42, %p43
    %p45 = scmp.ne.s32.totalorder %s34, %s35
    %p46 = scmp.eq.s32.totalorder %s14, 0
    %p47 = por %p45, %p46
    %p48 = scmp.ne.s32.totalorder %s34, %s35
    %p49 = scmp.eq.s32.totalorder %s15, 1
    %p50 = por %p48, %p49
    %p52 = scmp.ne.s32.totalorder %s35, %s51
    %p53 = scmp.eq.s32.totalorder %s15, 0
    %p54 = por %p52, %p53
    %s56 = sadd.s32 %s55, 1
    %p59 = scmp.eq.s32.totalorder %s9, 1
    %p60 = scmp.ne.s32.totalorder %s55, %s57
    %p61 = scmp.eq.s32.totalorder %s9, 0
    %p62 = por %p60, %p61
    %p63 = scmp.ne.s32.totalorder %s55, %s57
    %p64 = scmp.eq.s32.totalorder %s14, 1
    %p65 = por %p63, %p64
    %p66 = scmp.ne.s32.totalorder %s57, %s58
    %p67 = scmp.eq.s32.totalorder %s14, 0
    %p68 = por %p66, %p67
    %p69 = scmp.ne.s32.totalorder %s57, %s58
    %p70 = scmp.eq.s32.totalorder %s15, 1
    %p71 = por %p69, %p70
    %p73 = scmp.ne.s32.totalorder %s58, %s72
    %p74 = scmp.eq.s32.totalorder %s15, 0
    %p75 = por %p73, %p74
    %s77 = sadd.s32 %s76, 1
    %p80 = scmp.eq.s32.totalorder %s9, 1
    %p81 = scmp.ne.s32.totalorder %s76, %s78
    %p82 = scmp.eq.s32.totalorder %s9, 0
    %p83 = por %p81, %p82
    %p84 = scmp.ne.s32.totalorder %s76, %s78
    %p85 = scmp.eq.s32.totalorder %s14, 1
    %p86 = por %p84, %p85
    %p87 = scmp.ne.s32.totalorder %s78, %s79
    %p88 = scmp.eq.s32.totalorder %s14, 0
    %p89 = por %p87, %p88
    %p90 = scmp.ne.s32.totalorder %s78, %s79
    %p91 = scmp.eq.s32.totalorder %s15, 1
    %p92 = por %p90, %p91
    %p94 = scmp.ne.s32.totalorder %s79, %s93
    %p95 = scmp.eq.s32.totalorder %s15, 0
    %p96 = por %p94, %p95
    %s97 = ssub.s32 %s16, %s28
    %s98 = ssub.s32 %s17, %s24
    %s99 = sor.u32 %s97, %s98
    %p100 = scmp.eq.s32.totalorder %s99, 0
    %s102 = sadd.s32 %s101, 1
    %s103 = scalar_select %p100, %s101, %s102
    %p106 = pneg %p100
    %p107 = scmp.eq.s32.totalorder %s9, 1
    %p108 = por %p106, %p107
    %p109 = scmp.ne.s32.totalorder %s101, %s104
    %p110 = scmp.eq.s32.totalorder %s9, 0
    %p111 = por %p109, %p110
    %p112 = scmp.ne.s32.totalorder %s101, %s104
    %p113 = scmp.eq.s32.totalorder %s14, 1
    %p114 = por %p112, %p113
    %p115 = scmp.ne.s32.totalorder %s104, %s105
    %p116 = scmp.eq.s32.totalorder %s14, 0
    %p117 = por %p115, %p116
    %p118 = scmp.ne.s32.totalorder %s104, %s105
    %p119 = scmp.eq.s32.totalorder %s15, 1
    %p120 = por %p118, %p119
    %p122 = scmp.ne.s32.totalorder %s105, %s121
    %p123 = scmp.eq.s32.totalorder %s15, 0
    %p124 = por %p122, %p123
    %p125 = scmp.le.s32.totalorder 1, %s9
    %p126 = scmp.lt.s32.totalorder %s9, 3
    %p127 = pnand %p125, %p126
    %p128 = pneg %p127
    // Predicated region
    $region9: #{self_attention.1} parent=5 // pred_check
      _
    $region10: #{self_attention.1} parent=5 // pred_check_branch
      %130 = sbr.rel (%p127) target = $region12
    $region11: #{self_attention.1} parent=5 // pred_region
      %s131 = ssub.s32 %s9, 1
      // Predicated region
      $region13: #{self_attention.1} parent=11 // pred_check
        %p132 = pneg %p68
      $region14: #{self_attention.1} parent=11 // pred_check_branch
        %134 = sbr.rel (%p132) target = $region16
      $region15: #{self_attention.1} parent=11 // pred_region
        _
      $region16: #{self_attention.1} parent=11 // pred_fallthru
        _
      // Predicated region
      $region17: #{self_attention.1} parent=11 // pred_check
        %p135 = pneg %p89
      $region18: #{self_attention.1} parent=11 // pred_check_branch
        %137 = sbr.rel (%p135) target = $region20
      $region19: #{self_attention.1} parent=11 // pred_region
        _
      $region20: #{self_attention.1} parent=11 // pred_fallthru
        _
    $region12: #{self_attention.1} parent=5 // pred_fallthru
      _
    %p138 = scmp.lt.s32.totalorder %s9, 2
    // Predicated region
    $region21: #{self_attention.1} parent=5 // pred_check
      %p139 = pneg %p138
    $region22: #{self_attention.1} parent=5 // pred_check_branch
      %141 = sbr.rel (%p139) target = $region24
    $region23: #{self_attention.1} parent=5 // pred_region
      // Predicated region
      $region25: #{self_attention.1} parent=23 // pred_check
        %p142 = pneg %p41
      $region26: #{self_attention.1} parent=23 // pred_check_branch
        %144 = sbr.rel (%p142) target = $region28
      $region27: #{self_attention.1} parent=23 // pred_region
        %p145 = scmp.lt.s32.totalorder %s16, 1
        %s146 = scalar_select %p145, %s16, 1
        %s147 = smul.addr %s146, 8
        %s148 = smul.addr %s147, 8
        %s149 = scalar_lea.vmem %s0, %s148
      $region28: #{self_attention.1} parent=23 // pred_fallthru
        _
    $region24: #{self_attention.1} parent=5 // pred_fallthru
      _
    %p150 = scmp.le.s32.totalorder 1, %s9
    %p151 = scmp.lt.s32.totalorder %s9, 3
    %p152 = pnand %p150, %p151
    %p153 = pneg %p152
    // Predicated region
    $region29: #{self_attention.1} parent=5 // pred_check
      _
    $region30: #{self_attention.1} parent=5 // pred_check_branch
      %155 = sbr.rel (%p152) target = $region32
    $region31: #{self_attention.1} parent=5 // pred_region
      %s156 = ssub.s32 %s9, 1
      %p157 = scmp.lt.s32.totalorder %s18, 1
      %s158 = scalar_select %p157, %s18, 1
      %s159 = smul.addr %s158, 8
      %s160 = smul.addr %s159, 8
      %s161 = scalar_lea.vmem %s0, %s160
      %p162 = pneg %p47
      %p163 = pneg %p44
      %p164 = pneg %p68
      %p165 = pneg %p65
      %p166 = pneg %p89
      %p167 = pneg %p86
      %p168 = pneg %p117
      %p169 = pneg %p114
      %s170 = smul.u32 2, %s19
      %p171 = scmp.lt.s32.totalorder %s18, 1
      %s172 = scalar_select %p171, %s18, 1
      %p173 = scmp.lt.s32.totalorder %s170, 1
      %s174 = scalar_select %p173, %s170, 1
      %s175 = smul.addr %s172, 8
      %s176 = sadd.s32 %s174, %s175
      %s177 = smul.addr %s176, 8
      %s178 = scalar_lea.vmem %s3, %s177
      %p179 = scmp.lt.s32.totalorder %s18, 1
      %s180 = scalar_select %p179, %s18, 1
      %s181 = smul.addr %s180, 8
      %s182 = smul.addr %s181, 8
      %s183 = scalar_lea.vmem %s0, %s182
      %s184 = smul.u32 2, %s19
      %p185 = scmp.lt.s32.totalorder %s18, 1
      %s186 = scalar_select %p185, %s18, 1
      %p187 = scmp.lt.s32.totalorder %s184, 1
      %s188 = scalar_select %p187, %s184, 1
      %s189 = smul.addr %s186, 8
      %s190 = sadd.s32 %s188, %s189
      %s191 = smul.addr %s190, 8
      %s192 = scalar_lea.vmem %s3, %s191
      %s193 = smul.u32 2, %s19
      %p195 = scmp.eq.s32.totalorder %s19, 0
      // Predicated region
      $region33: #{self_attention.1} parent=31 // pred_check
        %p196 = pneg %p195
      $region34: #{self_attention.1} parent=31 // pred_check_branch
        %198 = sbr.rel (%p196) target = $region36
      $region35: #{self_attention.1} parent=31 // pred_region
        %v199 = vld [vmem:[%s183] sm:$0xff]
        %v200 = vld [vmem:[%s183 + $0x8] sm:$0xff]
        %v201 = vld [vmem:[%s183 + $0x10] sm:$0xff]
        %v202 = vld [vmem:[%s183 + $0x18] sm:$0xff]
        %v203 = vld [vmem:[%s183 + $0x20] sm:$0xff]
        %v204 = vld [vmem:[%s183 + $0x28] sm:$0xff]
        %v205 = vld [vmem:[%s183 + $0x30] sm:$0xff]
        %v206 = vld [vmem:[%s183 + $0x38] sm:$0xff]
        %207 = vxpose.xlu0.b32.start [1/16] %v199, 128
        %208 = vxpose.xlu0.b32.cont [2/16] %v201, 128
        %209 = vxpose.xlu0.b32.cont [3/16] %v203, 128
        %210 = vxpose.xlu0.b32.cont [4/16] %v205, 128
        %211 = vxpose.xlu0.b32.cont [5/16] 0.0, 128
        %212 = vxpose.xlu0.b32.cont [6/16] 0.0, 128
        %213 = vxpose.xlu0.b32.cont [7/16] 0.0, 128
        %214 = vxpose.xlu0.b32.cont [8/16] 0.0, 128
        %215 = vxpose.xlu0.b32.cont [9/16] 0.0, 128
        %216 = vxpose.xlu0.b32.cont [10/16] 0.0, 128
        %217 = vxpose.xlu0.b32.cont [11/16] 0.0, 128
        %218 = vxpose.xlu0.b32.cont [12/16] 0.0, 128
        %219 = vxpose.xlu0.b32.cont [13/16] 0.0, 128
        %220 = vxpose.xlu0.b32.cont [14/16] 0.0, 128
        %221 = vxpose.xlu0.b32.cont [15/16] 0.0, 128
        %222 = vxpose.xlu0.b32.end [16/16] 0.0, 128
        %v223 = vpop.trf.xlu0
        %v224 = vpop.trf.xlu0
        %v225 = vpop.trf.xlu0
        %v226 = vpop.trf.xlu0
        %v227 = vpop.trf.xlu0
        %v228 = vpop.trf.xlu0
        %v229 = vpop.trf.xlu0
        %v230 = vpop.trf.xlu0
        %v231 = vpop.trf.xlu0
        %v232 = vpop.trf.xlu0
        %v233 = vpop.trf.xlu0
        %v234 = vpop.trf.xlu0
        %v235 = vpop.trf.xlu0
        %v236 = vpop.trf.xlu0
        %v237 = vpop.trf.xlu0
        %v238 = vpop.trf.xlu0
        %239 = vxpose.xlu0.b32.start [1/16] %v200, 128
        %240 = vxpose.xlu0.b32.cont [2/16] %v202, 128
        %241 = vxpose.xlu0.b32.cont [3/16] %v204, 128
        %242 = vxpose.xlu0.b32.cont [4/16] %v206, 128
        %243 = vxpose.xlu0.b32.cont [5/16] 0.0, 128
        %244 = vxpose.xlu0.b32.cont [6/16] 0.0, 128
        %245 = vxpose.xlu0.b32.cont [7/16] 0.0, 128
        %246 = vxpose.xlu0.b32.cont [8/16] 0.0, 128
        %247 = vxpose.xlu0.b32.cont [9/16] 0.0, 128
        %248 = vxpose.xlu0.b32.cont [10/16] 0.0, 128
        %249 = vxpose.xlu0.b32.cont [11/16] 0.0, 128
        %250 = vxpose.xlu0.b32.cont [12/16] 0.0, 128
        %251 = vxpose.xlu0.b32.cont [13/16] 0.0, 128
        %252 = vxpose.xlu0.b32.cont [14/16] 0.0, 128
        %253 = vxpose.xlu0.b32.cont [15/16] 0.0, 128
        %254 = vxpose.xlu0.b32.end [16/16] 0.0, 128
        %v255 = vpop.trf.xlu0
        %v256 = vpop.trf.xlu0
        %v257 = vpop.trf.xlu0
        %v258 = vpop.trf.xlu0
        %v259 = vpop.trf.xlu0
        %v260 = vpop.trf.xlu0
        %v261 = vpop.trf.xlu0
        %v262 = vpop.trf.xlu0
        %v263 = vpop.trf.xlu0
        %v264 = vpop.trf.xlu0
        %v265 = vpop.trf.xlu0
        %v266 = vpop.trf.xlu0
        %v267 = vpop.trf.xlu0
        %v268 = vpop.trf.xlu0
        %v269 = vpop.trf.xlu0
        %v270 = vpop.trf.xlu0
        %v271 = vpack.c.bf16 %v224, %v223
        %v272 = vpack.c.bf16 %v226, %v225
        %v273 = vpack.c.bf16 %v228, %v227
        %v274 = vpack.c.bf16 %v230, %v229
        %v275 = vpack.c.bf16 %v232, %v231
        %v276 = vpack.c.bf16 %v234, %v233
        %v277 = vpack.c.bf16 %v236, %v235
        %v278 = vpack.c.bf16 %v238, %v237
        %v279 = vpack.c.bf16 %v256, %v255
        %v280 = vpack.c.bf16 %v258, %v257
        %v281 = vpack.c.bf16 %v260, %v259
        %v282 = vpack.c.bf16 %v262, %v261
        %v283 = vpack.c.bf16 %v264, %v263
        %v284 = vpack.c.bf16 %v266, %v265
        %v285 = vpack.c.bf16 %v268, %v267
        %v286 = vpack.c.bf16 %v270, %v269
        %v287 = vld [vmem:[%s1] sm:$0xff]
        %v288 = vld [vmem:[%s1 + $0x8] sm:$0xf]
        %v289 = vld [vmem:[%s1 + $0xc] sm:$0xff]
        %v290 = vld [vmem:[%s1 + $0x14] sm:$0xf]
        %v291 = vld [vmem:[%s1 + $0x18] sm:$0xff]
        %v292 = vld [vmem:[%s1 + $0x20] sm:$0xf]
        %v293 = vld [vmem:[%s1 + $0x24] sm:$0xff]
        %v294 = vld [vmem:[%s1 + $0x2c] sm:$0xf]
        %v295 = vld [vmem:[%s2] sm:$0x7]
        %v297 = vlaneseq
        %v298 = vshrl.u32 %v297, 7
        %v299 = vsub.s32 0, %v298
        %v300 = vrot.slane %v295, %v299
        %v301 = vlaneseq
        %v302 = vshrl.u32 %v301, 7
        %v303 = vsub.s32 1, %v302
        %v304 = vrot.slane %v295, %v303
        %v305 = vlaneseq
        %v306 = vshrl.u32 %v305, 7
        %v307 = vsub.s32 2, %v306
        %v308 = vrot.slane %v295, %v307
        %v320 = vunpack.c.l.b16 %v287
        %v321 = vunpack.c.h.b16 %v287
        %v322 = vunpack.c.l.b16 %v288
        %v323 = vunpack.c.l.b16 %v289
        %v324 = vunpack.c.h.b16 %v289
        %v325 = vunpack.c.l.b16 %v290
        %v326 = vunpack.c.l.b16 %v291
        %v327 = vunpack.c.h.b16 %v291
        %v328 = vunpack.c.l.b16 %v292
        %v329 = vunpack.c.l.b16 %v293
        %v330 = vunpack.c.h.b16 %v293
        %v331 = vunpack.c.l.b16 %v294
        %v332 = vpack.c.b16 %v323, %v320
        %v333 = vpack.c.b16 %v324, %v321
        %v334 = vpack.c.b16 %v325, %v322
        %v335 = vpack.c.b16 %v329, %v326
        %v336 = vpack.c.b16 %v330, %v327
        %v337 = vpack.c.b16 %v331, %v328
        %vm344 = vcmask 261120
        %v346 = vsel %vm344, %v271, 0
        %v349 = vsel %vm344, %v272, 0
        %v352 = vsel %vm344, %v273, 0
        %v355 = vsel %vm344, %v274, 0
        %v358 = vsel %vm344, %v275, 0
        %v361 = vsel %vm344, %v276, 0
        %v364 = vsel %vm344, %v277, 0
        %v367 = vsel %vm344, %v278, 0
        %v370 = vsel %vm344, %v279, 0
        %v373 = vsel %vm344, %v280, 0
        %v376 = vsel %vm344, %v281, 0
        %v379 = vsel %vm344, %v282, 0
        %v382 = vsel %vm344, %v283, 0
        %v385 = vsel %vm344, %v284, 0
        %v388 = vsel %vm344, %v285, 0
        %v391 = vsel %vm344, %v286, 0
        %393 = vmatprep.subr.bf16.mxu0 %v333
        %394 = vmatpush1.bf16.msra.mxu0 %v332
        %395 = vmatprep.subr.bf16.mxu0 %v336
        %396 = vmatpush1.bf16.msra.mxu0 %v335
        %397 = vmatprep.subr.bf16.mxu0 0
        %398 = vmatpush1.bf16.msra.mxu0 0
        %399 = vmatprep.subr.bf16.mxu0 0
        %400 = vmatpush1.bf16.msra.mxu0 0
        %401 = vmatprep.subr.bf16.mxu0 0
        %402 = vmatpush1.bf16.msra.mxu0 0
        %403 = vmatprep.subr.bf16.mxu0 0
        %404 = vmatpush1.bf16.msra.mxu0 0
        %405 = vmatprep.subr.bf16.mxu0 0
        %406 = vmatpush1.bf16.msra.mxu0 0
        %407 = vmatprep.subr.bf16.mxu0 0
        %408 = vmatpush1.bf16.msra.mxu0 0
        %409 = vmatprep.subr.bf16.mxu0 0
        %410 = vmatpush1.bf16.msra.mxu0 0
        %411 = vmatprep.subr.bf16.mxu0 0
        %412 = vmatpush1.bf16.msra.mxu0 0
        %413 = vmatprep.subr.bf16.mxu0 0
        %414 = vmatpush1.bf16.msra.mxu0 0
        %415 = vmatprep.subr.bf16.mxu0 0
        %416 = vmatpush1.bf16.msra.mxu0 0
        %417 = vmatprep.subr.bf16.mxu0 0
        %418 = vmatpush1.bf16.msra.mxu0 0
        %419 = vmatprep.subr.bf16.mxu0 0
        %420 = vmatpush1.bf16.msra.mxu0 0
        %421 = vmatprep.subr.bf16.mxu0 0
        %422 = vmatpush1.bf16.msra.mxu0 0
        %423 = vmatprep.subr.bf16.mxu0 0
        %424 = vmatpush1.bf16.msra.mxu0 0
        %425 = vmatprep.mubr.bf16.mxu0 0
        %426 = vmatmul.mubr.bf16.gmra.mrb[0].mxu0 %v346
        %v427 = vpop.f32.mrb[0].mxu0
        %v428 = vadd.f32 %v300, %v427
        %v429 = vpop.f32.mrb[0].mxu0
        %v430 = vadd.f32 %v304, %v429
        %v431 = vpop.f32.mrb[0].mxu0
        %v432 = vadd.f32 %v300, %v431
        %v433 = vpop.f32.mrb[0].mxu0
        %v434 = vadd.f32 %v304, %v433
        %435 = vmatprep.mubr.bf16.mxu0 0
        %436 = vmatmul.mubr.bf16.gmra.mrb[0].mxu0 %v349
        %v437 = vpop.f32.mrb[0].mxu0
        %v438 = vadd.f32 %v300, %v437
        %v439 = vpop.f32.mrb[0].mxu0
        %v440 = vadd.f32 %v304, %v439
        %v441 = vpop.f32.mrb[0].mxu0
        %v442 = vadd.f32 %v300, %v441
        %v443 = vpop.f32.mrb[0].mxu0
        %v444 = vadd.f32 %v304, %v443
        %445 = vmatprep.mubr.bf16.mxu0 0
        %446 = vmatmul.mubr.bf16.gmra.mrb[0].mxu0 %v352
        %v447 = vpop.f32.mrb[0].mxu0
        %v448 = vadd.f32 %v300, %v447
        %v449 = vpop.f32.mrb[0].mxu0
        %v450 = vadd.f32 %v304, %v449
        %v451 = vpop.f32.mrb[0].mxu0
        %v452 = vadd.f32 %v300, %v451
        %v453 = vpop.f32.mrb[0].mxu0
        %v454 = vadd.f32 %v304, %v453
        %455 = vmatprep.mubr.bf16.mxu0 0
        %456 = vmatmul.mubr.bf16.gmra.mrb[0].mxu0 %v355
        %v457 = vpop.f32.mrb[0].mxu0
        %v458 = vadd.f32 %v300, %v457
        %v459 = vpop.f32.mrb[0].mxu0
        %v460 = vadd.f32 %v304, %v459
        %v461 = vpop.f32.mrb[0].mxu0
        %v462 = vadd.f32 %v300, %v461
        %v463 = vpop.f32.mrb[0].mxu0
        %v464 = vadd.f32 %v304, %v463
        %465 = vmatprep.mubr.bf16.mxu0 0
        %466 = vmatmul.mubr.bf16.gmra.mrb[0].mxu0 %v358
        %v467 = vpop.f32.mrb[0].mxu0
        %v468 = vadd.f32 %v300, %v467
        %v469 = vpop.f32.mrb[0].mxu0
        %v470 = vadd.f32 %v304, %v469
        %v471 = vpop.f32.mrb[0].mxu0
        %v472 = vadd.f32 %v300, %v471
        %v473 = vpop.f32.mrb[0].mxu0
        %v474 = vadd.f32 %v304, %v473
        %475 = vmatprep.mubr.bf16.mxu0 0
        %476 = vmatmul.mubr.bf16.gmra.mrb[0].mxu0 %v361
        %v477 = vpop.f32.mrb[0].mxu0
        %v478 = vadd.f32 %v300, %v477
        %v479 = vpop.f32.mrb[0].mxu0
        %v480 = vadd.f32 %v304, %v479
        %v481 = vpop.f32.mrb[0].mxu0
        %v482 = vadd.f32 %v300, %v481
        %v483 = vpop.f32.mrb[0].mxu0
        %v484 = vadd.f32 %v304, %v483
        %485 = vmatprep.mubr.bf16.mxu0 0
        %486 = vmatmul.mubr.bf16.gmra.mrb[0].mxu0 %v364
        %v487 = vpop.f32.mrb[0].mxu0
        %v488 = vadd.f32 %v300, %v487
        %v489 = vpop.f32.mrb[0].mxu0
        %v490 = vadd.f32 %v304, %v489
        %v491 = vpop.f32.mrb[0].mxu0
        %v492 = vadd.f32 %v300, %v491
        %v493 = vpop.f32.mrb[0].mxu0
        %v494 = vadd.f32 %v304, %v493
        %495 = vmatprep.mubr.bf16.mxu0 0
        %496 = vmatmul.mubr.bf16.gmra.mrb[0].mxu0 %v367
        %v497 = vpop.f32.mrb[0].mxu0
        %v498 = vadd.f32 %v300, %v497
        %v499 = vpop.f32.mrb[0].mxu0
        %v500 = vadd.f32 %v304, %v499
        %v501 = vpop.f32.mrb[0].mxu0
        %v502 = vadd.f32 %v300, %v501
        %v503 = vpop.f32.mrb[0].mxu0
        %v504 = vadd.f32 %v304, %v503
        %505 = vmatprep.mubr.bf16.mxu0 0
        %506 = vmatmul.mubr.bf16.gmra.mrb[0].mxu0 %v370
        %v507 = vpop.f32.mrb[0].mxu0
        %v508 = vadd.f32 %v300, %v507
        %v509 = vpop.f32.mrb[0].mxu0
        %v510 = vadd.f32 %v304, %v509
        %v511 = vpop.f32.mrb[0].mxu0
        %v512 = vadd.f32 %v300, %v511
        %v513 = vpop.f32.mrb[0].mxu0
        %v514 = vadd.f32 %v304, %v513
        %515 = vmatprep.mubr.bf16.mxu0 0
        %516 = vmatmul.mubr.bf16.gmra.mrb[0].mxu0 %v373
        %v517 = vpop.f32.mrb[0].mxu0
        %v518 = vadd.f32 %v300, %v517
        %v519 = vpop.f32.mrb[0].mxu0
        %v520 = vadd.f32 %v304, %v519
        %v521 = vpop.f32.mrb[0].mxu0
        %v522 = vadd.f32 %v300, %v521
        %v523 = vpop.f32.mrb[0].mxu0
        %v524 = vadd.f32 %v304, %v523
        %525 = vmatprep.mubr.bf16.mxu0 0
        %526 = vmatmul.mubr.bf16.gmra.mrb[0].mxu0 %v376
        %v527 = vpop.f32.mrb[0].mxu0
        %v528 = vadd.f32 %v300, %v527
        %v529 = vpop.f32.mrb[0].mxu0
        %v530 = vadd.f32 %v304, %v529
        %v531 = vpop.f32.mrb[0].mxu0
        %v532 = vadd.f32 %v300, %v531
        %v533 = vpop.f32.mrb[0].mxu0
        %v534 = vadd.f32 %v304, %v533
        %535 = vmatprep.mubr.bf16.mxu0 0
        %536 = vmatmul.mubr.bf16.gmra.mrb[0].mxu0 %v379
        %v537 = vpop.f32.mrb[0].mxu0
        %v538 = vadd.f32 %v300, %v537
        %v539 = vpop.f32.mrb[0].mxu0
        %v540 = vadd.f32 %v304, %v539
        %v541 = vpop.f32.mrb[0].mxu0
        %v542 = vadd.f32 %v300, %v541
        %v543 = vpop.f32.mrb[0].mxu0
        %v544 = vadd.f32 %v304, %v543
        %545 = vmatprep.mubr.bf16.mxu0 0
        %546 = vmatmul.mubr.bf16.gmra.mrb[0].mxu0 %v382
        %v547 = vpop.f32.mrb[0].mxu0
        %v548 = vadd.f32 %v300, %v547
        %v549 = vpop.f32.mrb[0].mxu0
        %v550 = vadd.f32 %v304, %v549
        %v551 = vpop.f32.mrb[0].mxu0
        %v552 = vadd.f32 %v300, %v551
        %v553 = vpop.f32.mrb[0].mxu0
        %v554 = vadd.f32 %v304, %v553
        %555 = vmatprep.mubr.bf16.mxu0 0
        %556 = vmatmul.mubr.bf16.gmra.mrb[0].mxu0 %v385
        %v557 = vpop.f32.mrb[0].mxu0
        %v558 = vadd.f32 %v300, %v557
        %v559 = vpop.f32.mrb[0].mxu0
        %v560 = vadd.f32 %v304, %v559
        %v561 = vpop.f32.mrb[0].mxu0
        %v562 = vadd.f32 %v300, %v561
        %v563 = vpop.f32.mrb[0].mxu0
        %v564 = vadd.f32 %v304, %v563
        %565 = vmatprep.mubr.bf16.mxu0 0
        %566 = vmatmul.mubr.bf16.gmra.mrb[0].mxu0 %v388
        %v567 = vpop.f32.mrb[0].mxu0
        %v568 = vadd.f32 %v300, %v567
        %v569 = vpop.f32.mrb[0].mxu0
        %v570 = vadd.f32 %v304, %v569
        %v571 = vpop.f32.mrb[0].mxu0
        %v572 = vadd.f32 %v300, %v571
        %v573 = vpop.f32.mrb[0].mxu0
        %v574 = vadd.f32 %v304, %v573
        %575 = vmatprep.mubr.bf16.mxu0 0
        %576 = vmatmul.mubr.bf16.gmra.mrb[0].mxu0 %v391
        %v577 = vpop.f32.mrb[0].mxu0
        %v578 = vadd.f32 %v300, %v577
        %v579 = vpop.f32.mrb[0].mxu0
        %v580 = vadd.f32 %v304, %v579
        %v581 = vpop.f32.mrb[0].mxu0
        %v582 = vadd.f32 %v300, %v581
        %v583 = vpop.f32.mrb[0].mxu0
        %v584 = vadd.f32 %v304, %v583
        %585 = vdwg.mxu0
        %586 = vmatprep.subr.bf16.mxu0 0
        %587 = vmatpush1.bf16.msra.mxu0 %v334
        %588 = vmatprep.subr.bf16.mxu0 0
        %589 = vmatpush1.bf16.msra.mxu0 %v337
        %590 = vmatprep.subr.bf16.mxu0 0
        %591 = vmatpush1.bf16.msra.mxu0 0
        %592 = vmatprep.subr.bf16.mxu0 0
        %593 = vmatpush1.bf16.msra.mxu0 0
        %594 = vmatprep.subr.bf16.mxu0 0
        %595 = vmatpush1.bf16.msra.mxu0 0
        %596 = vmatprep.subr.bf16.mxu0 0
        %597 = vmatpush1.bf16.msra.mxu0 0
        %598 = vmatprep.subr.bf16.mxu0 0
        %599 = vmatpush1.bf16.msra.mxu0 0
        %600 = vmatprep.subr.bf16.mxu0 0
        %601 = vmatpush1.bf16.msra.mxu0 0
        %602 = vmatprep.subr.bf16.mxu0 0
        %603 = vmatpush1.bf16.msra.mxu0 0
        %604 = vmatprep.subr.bf16.mxu0 0
        %605 = vmatpush1.bf16.msra.mxu0 0
        %606 = vmatprep.subr.bf16.mxu0 0
        %607 = vmatpush1.bf16.msra.mxu0 0
        %608 = vmatprep.subr.bf16.mxu0 0
        %609 = vmatpush1.bf16.msra.mxu0 0
        %610 = vmatprep.subr.bf16.mxu0 0
        %611 = vmatpush1.bf16.msra.mxu0 0
        %612 = vmatprep.subr.bf16.mxu0 0
        %613 = vmatpush1.bf16.msra.mxu0 0
        %614 = vmatprep.subr.bf16.mxu0 0
        %615 = vmatpush1.bf16.msra.mxu0 0
        %616 = vmatprep.subr.bf16.mxu0 0
        %617 = vmatpush1.bf16.msra.mxu0 0
        %618 = vmatprep.mubr.bf16.mxu0 0
        %619 = vmatmul.mubr.bf16.gmra.mrb[0].mxu0 %v346
        %v620 = vpop.f32.mrb[0].mxu0
        %v621 = vadd.f32 %v308, %v620
        %v622 = vpop.f32.mrb[0].mxu0
        %v623 = vpop.f32.mrb[0].mxu0
        %v624 = vadd.f32 %v308, %v623
        %v625 = vpop.f32.mrb[0].mxu0
        %626 = vmatprep.mubr.bf16.mxu0 0
        %627 = vmatmul.mubr.bf16.gmra.mrb[0].mxu0 %v349
        %v628 = vpop.f32.mrb[0].mxu0
        %v629 = vadd.f32 %v308, %v628
        %v630 = vpop.f32.mrb[0].mxu0
        %v631 = vpop.f32.mrb[0].mxu0
        %v632 = vadd.f32 %v308, %v631
        %v633 = vpop.f32.mrb[0].mxu0
        %634 = vmatprep.mubr.bf16.mxu0 0
        %635 = vmatmul.mubr.bf16.gmra.mrb[0].mxu0 %v352
        %v636 = vpop.f32.mrb[0].mxu0
        %v637 = vadd.f32 %v308, %v636
        %v638 = vpop.f32.mrb[0].mxu0
        %v639 = vpop.f32.mrb[0].mxu0
        %v640 = vadd.f32 %v308, %v639
        %v641 = vpop.f32.mrb[0].mxu0
        %642 = vmatprep.mubr.bf16.mxu0 0
        %643 = vmatmul.mubr.bf16.gmra.mrb[0].mxu0 %v355
        %v644 = vpop.f32.mrb[0].mxu0
        %v645 = vadd.f32 %v308, %v644
        %v646 = vpop.f32.mrb[0].mxu0
        %v647 = vpop.f32.mrb[0].mxu0
        %v648 = vadd.f32 %v308, %v647
        %v649 = vpop.f32.mrb[0].mxu0
        %650 = vmatprep.mubr.bf16.mxu0 0
        %651 = vmatmul.mubr.bf16.gmra.mrb[0].mxu0 %v358
        %v652 = vpop.f32.mrb[0].mxu0
        %v653 = vadd.f32 %v308, %v652
        %v654 = vpop.f32.mrb[0].mxu0
        %v655 = vpop.f32.mrb[0].mxu0
        %v656 = vadd.f32 %v308, %v655
        %v657 = vpop.f32.mrb[0].mxu0
        %658 = vmatprep.mubr.bf16.mxu0 0
        %659 = vmatmul.mubr.bf16.gmra.mrb[0].mxu0 %v361
        %v660 = vpop.f32.mrb[0].mxu0
        %v661 = vadd.f32 %v308, %v660
        %v662 = vpop.f32.mrb[0].mxu0
        %v663 = vpop.f32.mrb[0].mxu0
        %v664 = vadd.f32 %v308, %v663
        %v665 = vpop.f32.mrb[0].mxu0
        %666 = vmatprep.mubr.bf16.mxu0 0
        %667 = vmatmul.mubr.bf16.gmra.mrb[0].mxu0 %v364
        %v668 = vpop.f32.mrb[0].mxu0
        %v669 = vadd.f32 %v308, %v668
        %v670 = vpop.f32.mrb[0].mxu0
        %v671 = vpop.f32.mrb[0].mxu0
        %v672 = vadd.f32 %v308, %v671
        %v673 = vpop.f32.mrb[0].mxu0
        %674 = vmatprep.mubr.bf16.mxu0 0
        %675 = vmatmul.mubr.bf16.gmra.mrb[0].mxu0 %v367
        %v676 = vpop.f32.mrb[0].mxu0
        %v677 = vadd.f32 %v308, %v676
        %v678 = vpop.f32.mrb[0].mxu0
        %v679 = vpop.f32.mrb[0].mxu0
        %v680 = vadd.f32 %v308, %v679
        %v681 = vpop.f32.mrb[0].mxu0
        %682 = vmatprep.mubr.bf16.mxu0 0
        %683 = vmatmul.mubr.bf16.gmra.mrb[0].mxu0 %v370
        %v684 = vpop.f32.mrb[0].mxu0
        %v685 = vadd.f32 %v308, %v684
        %v686 = vpop.f32.mrb[0].mxu0
        %v687 = vpop.f32.mrb[0].mxu0
        %v688 = vadd.f32 %v308, %v687
        %v689 = vpop.f32.mrb[0].mxu0
        %690 = vmatprep.mubr.bf16.mxu0 0
        %691 = vmatmul.mubr.bf16.gmra.mrb[0].mxu0 %v373
        %v692 = vpop.f32.mrb[0].mxu0
        %v693 = vadd.f32 %v308, %v692
        %v694 = vpop.f32.mrb[0].mxu0
        %v695 = vpop.f32.mrb[0].mxu0
        %v696 = vadd.f32 %v308, %v695
        %v697 = vpop.f32.mrb[0].mxu0
        %698 = vmatprep.mubr.bf16.mxu0 0
        %699 = vmatmul.mubr.bf16.gmra.mrb[0].mxu0 %v376
        %v700 = vpop.f32.mrb[0].mxu0
        %v701 = vadd.f32 %v308, %v700
        %v702 = vpop.f32.mrb[0].mxu0
        %v703 = vpop.f32.mrb[0].mxu0
        %v704 = vadd.f32 %v308, %v703
        %v705 = vpop.f32.mrb[0].mxu0
        %706 = vmatprep.mubr.bf16.mxu0 0
        %707 = vmatmul.mubr.bf16.gmra.mrb[0].mxu0 %v379
        %v708 = vpop.f32.mrb[0].mxu0
        %v709 = vadd.f32 %v308, %v708
        %v710 = vpop.f32.mrb[0].mxu0
        %v711 = vpop.f32.mrb[0].mxu0
        %v712 = vadd.f32 %v308, %v711
        %v713 = vpop.f32.mrb[0].mxu0
        %714 = vmatprep.mubr.bf16.mxu0 0
        %715 = vmatmul.mubr.bf16.gmra.mrb[0].mxu0 %v382
        %v716 = vpop.f32.mrb[0].mxu0
        %v717 = vadd.f32 %v308, %v716
        %v718 = vpop.f32.mrb[0].mxu0
        %v719 = vpop.f32.mrb[0].mxu0
        %v720 = vadd.f32 %v308, %v719
        %v721 = vpop.f32.mrb[0].mxu0
        %722 = vmatprep.mubr.bf16.mxu0 0
        %723 = vmatmul.mubr.bf16.gmra.mrb[0].mxu0 %v385
        %v724 = vpop.f32.mrb[0].mxu0
        %v725 = vadd.f32 %v308, %v724
        %v726 = vpop.f32.mrb[0].mxu0
        %v727 = vpop.f32.mrb[0].mxu0
        %v728 = vadd.f32 %v308, %v727
        %v729 = vpop.f32.mrb[0].mxu0
        %730 = vmatprep.mubr.bf16.mxu0 0
        %731 = vmatmul.mubr.bf16.gmra.mrb[0].mxu0 %v388
        %v732 = vpop.f32.mrb[0].mxu0
        %v733 = vadd.f32 %v308, %v732
        %v734 = vpop.f32.mrb[0].mxu0
        %v735 = vpop.f32.mrb[0].mxu0
        %v736 = vadd.f32 %v308, %v735
        %v737 = vpop.f32.mrb[0].mxu0
        %738 = vmatprep.mubr.bf16.mxu0 0
        %739 = vmatmul.mubr.bf16.gmra.mrb[0].mxu0 %v391
        %v740 = vpop.f32.mrb[0].mxu0
        %v741 = vadd.f32 %v308, %v740
        %v742 = vpop.f32.mrb[0].mxu0
        %v743 = vpop.f32.mrb[0].mxu0
        %v744 = vadd.f32 %v308, %v743
        %v745 = vpop.f32.mrb[0].mxu0
        %746 = vdwg.mxu0
        %v747 = vpack.c.bf16 %v432, %v428
        %v748 = vpack.c.bf16 %v434, %v430
        %v749 = vpack.c.bf16 %v624, %v621
        %v750 = vpack.c.bf16 %v442, %v438
        %v751 = vpack.c.bf16 %v444, %v440
        %v752 = vpack.c.bf16 %v632, %v629
        %v753 = vpack.c.bf16 %v452, %v448
        %v754 = vpack.c.bf16 %v454, %v450
        %v755 = vpack.c.bf16 %v640, %v637
        %v756 = vpack.c.bf16 %v462, %v458
        %v757 = vpack.c.bf16 %v464, %v460
        %v758 = vpack.c.bf16 %v648, %v645
        %v759 = vpack.c.bf16 %v472, %v468
        %v760 = vpack.c.bf16 %v474, %v470
        %v761 = vpack.c.bf16 %v656, %v653
        %v762 = vpack.c.bf16 %v482, %v478
        %v763 = vpack.c.bf16 %v484, %v480
        %v764 = vpack.c.bf16 %v664, %v661
        %v765 = vpack.c.bf16 %v492, %v488
        %v766 = vpack.c.bf16 %v494, %v490
        %v767 = vpack.c.bf16 %v672, %v669
        %v768 = vpack.c.bf16 %v502, %v498
        %v769 = vpack.c.bf16 %v504, %v500
        %v770 = vpack.c.bf16 %v680, %v677
        %v771 = vpack.c.bf16 %v512, %v508
        %v772 = vpack.c.bf16 %v514, %v510
        %v773 = vpack.c.bf16 %v688, %v685
        %v774 = vpack.c.bf16 %v522, %v518
        %v775 = vpack.c.bf16 %v524, %v520
        %v776 = vpack.c.bf16 %v696, %v693
        %v777 = vpack.c.bf16 %v532, %v528
        %v778 = vpack.c.bf16 %v534, %v530
        %v779 = vpack.c.bf16 %v704, %v701
        %v780 = vpack.c.bf16 %v542, %v538
        %v781 = vpack.c.bf16 %v544, %v540
        %v782 = vpack.c.bf16 %v712, %v709
        %v783 = vpack.c.bf16 %v552, %v548
        %v784 = vpack.c.bf16 %v554, %v550
        %v785 = vpack.c.bf16 %v720, %v717
        %v786 = vpack.c.bf16 %v562, %v558
        %v787 = vpack.c.bf16 %v564, %v560
        %v788 = vpack.c.bf16 %v728, %v725
        %v789 = vpack.c.bf16 %v572, %v568
        %v790 = vpack.c.bf16 %v574, %v570
        %v791 = vpack.c.bf16 %v736, %v733
        %v792 = vpack.c.bf16 %v582, %v578
        %v793 = vpack.c.bf16 %v584, %v580
        %v794 = vpack.c.bf16 %v744, %v741
        %795 = vst [vmem:[#allocation2] sm:$0xff] %v747
        %796 = vst [vmem:[#allocation2 + $0x8] sm:$0xff] %v748
        %797 = vst [vmem:[#allocation2 + $0x10] sm:$0xff] %v749
        %798 = vst [vmem:[#allocation2 + $0x18] sm:$0xff] %v750
        %799 = vst [vmem:[#allocation2 + $0x20] sm:$0xff] %v751
        %800 = vst [vmem:[#allocation2 + $0x28] sm:$0xff] %v752
        %801 = vst [vmem:[#allocation2 + $0x30] sm:$0xff] %v753
        %802 = vst [vmem:[#allocation2 + $0x38] sm:$0xff] %v754
        %803 = vst [vmem:[#allocation2 + $0x40] sm:$0xff] %v755
        %804 = vst [vmem:[#allocation2 + $0x48] sm:$0xff] %v756
        %805 = vst [vmem:[#allocation2 + $0x50] sm:$0xff] %v757
        %806 = vst [vmem:[#allocation2 + $0x58] sm:$0xff] %v758
        %807 = vst [vmem:[#allocation2 + $0x60] sm:$0xff] %v759
        %808 = vst [vmem:[#allocation2 + $0x68] sm:$0xff] %v760
        %809 = vst [vmem:[#allocation2 + $0x70] sm:$0xff] %v761
        %810 = vst [vmem:[#allocation2 + $0x78] sm:$0xff] %v762
        %811 = vst [vmem:[#allocation2 + $0x80] sm:$0xff] %v763
        %812 = vst [vmem:[#allocation2 + $0x88] sm:$0xff] %v764
        %813 = vst [vmem:[#allocation2 + $0x90] sm:$0xff] %v765
        %814 = vst [vmem:[#allocation2 + $0x98] sm:$0xff] %v766
        %815 = vst [vmem:[#allocation2 + $0xa0] sm:$0xff] %v767
        %816 = vst [vmem:[#allocation2 + $0xa8] sm:$0xff] %v768
        %817 = vst [vmem:[#allocation2 + $0xb0] sm:$0xff] %v769
        %818 = vst [vmem:[#allocation2 + $0xb8] sm:$0xff] %v770
        %819 = vst [vmem:[#allocation2 + $0xc0] sm:$0xff] %v771
        %820 = vst [vmem:[#allocation2 + $0xc8] sm:$0xff] %v772
        %821 = vst [vmem:[#allocation2 + $0xd0] sm:$0xff] %v773
        %822 = vst [vmem:[#allocation2 + $0xd8] sm:$0xff] %v774
        %823 = vst [vmem:[#allocation2 + $0xe0] sm:$0xff] %v775
        %824 = vst [vmem:[#allocation2 + $0xe8] sm:$0xff] %v776
        %825 = vst [vmem:[#allocation2 + $0xf0] sm:$0xff] %v777
        %826 = vst [vmem:[#allocation2 + $0xf8] sm:$0xff] %v778
        %827 = vst [vmem:[#allocation2 + $0x100] sm:$0xff] %v779
        %828 = vst [vmem:[#allocation2 + $0x108] sm:$0xff] %v780
        %829 = vst [vmem:[#allocation2 + $0x110] sm:$0xff] %v781
        %830 = vst [vmem:[#allocation2 + $0x118] sm:$0xff] %v782
        %831 = vst [vmem:[#allocation2 + $0x120] sm:$0xff] %v783
        %832 = vst [vmem:[#allocation2 + $0x128] sm:$0xff] %v784
        %833 = vst [vmem:[#allocation2 + $0x130] sm:$0xff] %v785
        %834 = vst [vmem:[#allocation2 + $0x138] sm:$0xff] %v786
        %835 = vst [vmem:[#allocation2 + $0x140] sm:$0xff] %v787
        %836 = vst [vmem:[#allocation2 + $0x148] sm:$0xff] %v788
        %837 = vst [vmem:[#allocation2 + $0x150] sm:$0xff] %v789
        %838 = vst [vmem:[#allocation2 + $0x158] sm:$0xff] %v790
        %839 = vst [vmem:[#allocation2 + $0x160] sm:$0xff] %v791
        %840 = vst [vmem:[#allocation2 + $0x168] sm:$0xff] %v792
        %841 = vst [vmem:[#allocation2 + $0x170] sm:$0xff] %v793
        %842 = vst [vmem:[#allocation2 + $0x178] sm:$0xff] %v794
      $region36: #{self_attention.1} parent=31 // pred_fallthru
        _
      %s843 = smul.u32 %s19, 256
      %s844 = sshra.s32 %s843, 4
      %s845 = sand.u32 %s843, 15
      %s846 = smul.u32 %s844, 3
      %s847 = smul.addr %s846, 8
      %s848 = scalar_lea.vmem [#allocation2], %s847
      %v849 = vld [vmem:[%s848] sm:$0xff]
      %v850 = vld [vmem:[%s848 + $0x18] sm:$0xff]
      %v851 = vld [vmem:[%s848 + $0x30] sm:$0xff]
      %v852 = vld [vmem:[%s848 + $0x48] sm:$0xff]
      %v853 = vld [vmem:[%s848 + $0x60] sm:$0xff]
      %v854 = vld [vmem:[%s848 + $0x78] sm:$0xff]
      %v855 = vld [vmem:[%s848 + $0x90] sm:$0xff]
      %v856 = vld [vmem:[%s848 + $0xa8] sm:$0xff]
      %v857 = vld [vmem:[%s848 + $0xc0] sm:$0xff]
      %v858 = vld [vmem:[%s848 + $0xd8] sm:$0xff]
      %v859 = vld [vmem:[%s848 + $0xf0] sm:$0xff]
      %v860 = vld [vmem:[%s848 + $0x108] sm:$0xff]
      %v861 = vld [vmem:[%s848 + $0x120] sm:$0xff]
      %v862 = vld [vmem:[%s848 + $0x138] sm:$0xff]
      %v863 = vld [vmem:[%s848 + $0x150] sm:$0xff]
      %v864 = vld [vmem:[%s848 + $0x168] sm:$0xff]
      %v865 = vld [vmem:[#allocation2 + $0x8] sm:$0xff]
      %v866 = vld [vmem:[#allocation2 + $0x20] sm:$0xff]
      %v867 = vld [vmem:[#allocation2 + $0x38] sm:$0xff]
      %v868 = vld [vmem:[#allocation2 + $0x50] sm:$0xff]
      %v869 = vld [vmem:[#allocation2 + $0x68] sm:$0xff]
      %v870 = vld [vmem:[#allocation2 + $0x80] sm:$0xff]
      %v871 = vld [vmem:[#allocation2 + $0x98] sm:$0xff]
      %v872 = vld [vmem:[#allocation2 + $0xb0] sm:$0xff]
      %v873 = vld [vmem:[#allocation2 + $0xc8] sm:$0xff]
      %v874 = vld [vmem:[#allocation2 + $0xe0] sm:$0xff]
      %v875 = vld [vmem:[#allocation2 + $0xf8] sm:$0xff]
      %v876 = vld [vmem:[#allocation2 + $0x110] sm:$0xff]
      %v877 = vld [vmem:[#allocation2 + $0x128] sm:$0xff]
      %v878 = vld [vmem:[#allocation2 + $0x140] sm:$0xff]
      %v879 = vld [vmem:[#allocation2 + $0x158] sm:$0xff]
      %v880 = vld [vmem:[#allocation2 + $0x170] sm:$0xff]
      %v881 = vld [vmem:[#allocation2 + $0x10] sm:$0xff]
      %v882 = vld [vmem:[#allocation2 + $0x28] sm:$0xff]
      %v883 = vld [vmem:[#allocation2 + $0x40] sm:$0xff]
      %v884 = vld [vmem:[#allocation2 + $0x58] sm:$0xff]
      %v885 = vld [vmem:[#allocation2 + $0x70] sm:$0xff]
      %v886 = vld [vmem:[#allocation2 + $0x88] sm:$0xff]
      %v887 = vld [vmem:[#allocation2 + $0xa0] sm:$0xff]
      %v888 = vld [vmem:[#allocation2 + $0xb8] sm:$0xff]
      %v889 = vld [vmem:[#allocation2 + $0xd0] sm:$0xff]
      %v890 = vld [vmem:[#allocation2 + $0xe8] sm:$0xff]
      %v891 = vld [vmem:[#allocation2 + $0x100] sm:$0xff]
      %v892 = vld [vmem:[#allocation2 + $0x118] sm:$0xff]
      %v893 = vld [vmem:[#allocation2 + $0x130] sm:$0xff]
      %v894 = vld [vmem:[#allocation2 + $0x148] sm:$0xff]
      %v895 = vld [vmem:[#allocation2 + $0x160] sm:$0xff]
      %v896 = vld [vmem:[#allocation2 + $0x178] sm:$0xff]
      %897 = vmatprep.subr.bf16.mxu0 0
      %898 = vmatpush1.bf16.xpose.msra.mxu0 %v865
      %899 = vmatprep.subr.bf16.mxu0 0
      %900 = vmatpush1.bf16.xpose.msra.mxu0 %v866
      %901 = vmatprep.subr.bf16.mxu0 0
      %902 = vmatpush1.bf16.xpose.msra.mxu0 %v867
      %903 = vmatprep.subr.bf16.mxu0 0
      %904 = vmatpush1.bf16.xpose.msra.mxu0 %v868
      %905 = vmatprep.subr.bf16.mxu0 0
      %906 = vmatpush1.bf16.xpose.msra.mxu0 %v869
      %907 = vmatprep.subr.bf16.mxu0 0
      %908 = vmatpush1.bf16.xpose.msra.mxu0 %v870
      %909 = vmatprep.subr.bf16.mxu0 0
      %910 = vmatpush1.bf16.xpose.msra.mxu0 %v871
      %911 = vmatprep.subr.bf16.mxu0 0
      %912 = vmatpush1.bf16.xpose.msra.mxu0 %v872
      %913 = vmatprep.subr.bf16.mxu0 0
      %914 = vmatpush1.bf16.xpose.msra.mxu0 %v873
      %915 = vmatprep.subr.bf16.mxu0 0
      %916 = vmatpush1.bf16.xpose.msra.mxu0 %v874
      %917 = vmatprep.subr.bf16.mxu0 0
      %918 = vmatpush1.bf16.xpose.msra.mxu0 %v875
      %919 = vmatprep.subr.bf16.mxu0 0
      %920 = vmatpush1.bf16.xpose.msra.mxu0 %v876
      %921 = vmatprep.subr.bf16.mxu0 0
      %922 = vmatpush1.bf16.xpose.msra.mxu0 %v877
      %923 = vmatprep.subr.bf16.mxu0 0
      %924 = vmatpush1.bf16.xpose.msra.mxu0 %v878
      %925 = vmatprep.subr.bf16.mxu0 0
      %926 = vmatpush1.bf16.xpose.msra.mxu0 %v879
      %927 = vmatprep.subr.bf16.mxu0 0
      %928 = vmatpush1.bf16.xpose.msra.mxu0 %v880
      %929 = vmatprep.mubr.bf16.mxu0 0
      %930 = vmatmul.mubr.bf16.gmra.mrb[0].mxu0 %v849
      %v931 = vpop.f32.mrb[0].mxu0
      %v932 = vadd.f32 0.0, %v931
      %v933 = vpop.f32.mrb[0].mxu0
      %v934 = vadd.f32 0.0, %v933
      %v935 = vpop.f32.mrb[0].mxu0
      %v936 = vadd.f32 0.0, %v935
      %v937 = vpop.f32.mrb[0].mxu0
      %v938 = vadd.f32 0.0, %v937
      %939 = vmatprep.mubr.bf16.mxu0 0
      %940 = vmatmul.mubr.bf16.gmra.mrb[0].mxu0 %v850
      %v941 = vpop.f32.mrb[0].mxu0
      %v942 = vadd.f32 0.0, %v941
      %v943 = vpop.f32.mrb[0].mxu0
      %v944 = vadd.f32 0.0, %v943
      %v945 = vpop.f32.mrb[0].mxu0
      %v946 = vadd.f32 0.0, %v945
      %v947 = vpop.f32.mrb[0].mxu0
      %v948 = vadd.f32 0.0, %v947
      %949 = vmatprep.mubr.bf16.mxu0 0
      %950 = vmatmul.mubr.bf16.gmra.mrb[0].mxu0 %v851
      %v951 = vpop.f32.mrb[0].mxu0
      %v952 = vadd.f32 0.0, %v951
      %v953 = vpop.f32.mrb[0].mxu0
      %v954 = vadd.f32 0.0, %v953
      %v955 = vpop.f32.mrb[0].mxu0
      %v956 = vadd.f32 0.0, %v955
      %v957 = vpop.f32.mrb[0].mxu0
      %v958 = vadd.f32 0.0, %v957
      %959 = vmatprep.mubr.bf16.mxu0 0
      %960 = vmatmul.mubr.bf16.gmra.mrb[0].mxu0 %v852
      %v961 = vpop.f32.mrb[0].mxu0
      %v962 = vadd.f32 0.0, %v961
      %v963 = vpop.f32.mrb[0].mxu0
      %v964 = vadd.f32 0.0, %v963
      %v965 = vpop.f32.mrb[0].mxu0
      %v966 = vadd.f32 0.0, %v965
      %v967 = vpop.f32.mrb[0].mxu0
      %v968 = vadd.f32 0.0, %v967
      %969 = vmatprep.mubr.bf16.mxu0 0
      %970 = vmatmul.mubr.bf16.gmra.mrb[0].mxu0 %v853
      %v971 = vpop.f32.mrb[0].mxu0
      %v972 = vadd.f32 0.0, %v971
      %v973 = vpop.f32.mrb[0].mxu0
      %v974 = vadd.f32 0.0, %v973
      %v975 = vpop.f32.mrb[0].mxu0
      %v976 = vadd.f32 0.0, %v975
      %v977 = vpop.f32.mrb[0].mxu0
      %v978 = vadd.f32 0.0, %v977
      %979 = vmatprep.mubr.bf16.mxu0 0
      %980 = vmatmul.mubr.bf16.gmra.mrb[0].mxu0 %v854
      %v981 = vpop.f32.mrb[0].mxu0
      %v982 = vadd.f32 0.0, %v981
      %v983 = vpop.f32.mrb[0].mxu0
      %v984 = vadd.f32 0.0, %v983
      %v985 = vpop.f32.mrb[0].mxu0
      %v986 = vadd.f32 0.0, %v985
      %v987 = vpop.f32.mrb[0].mxu0
      %v988 = vadd.f32 0.0, %v987
      %989 = vmatprep.mubr.bf16.mxu0 0
      %990 = vmatmul.mubr.bf16.gmra.mrb[0].mxu0 %v855
      %v991 = vpop.f32.mrb[0].mxu0
      %v992 = vadd.f32 0.0, %v991
      %v993 = vpop.f32.mrb[0].mxu0
      %v994 = vadd.f32 0.0, %v993
      %v995 = vpop.f32.mrb[0].mxu0
      %v996 = vadd.f32 0.0, %v995
      %v997 = vpop.f32.mrb[0].mxu0
      %v998 = vadd.f32 0.0, %v997
      %999 = vmatprep.mubr.bf16.mxu0 0
      %1000 = vmatmul.mubr.bf16.gmra.mrb[0].mxu0 %v856
      %v1001 = vpop.f32.mrb[0].mxu0
      %v1002 = vadd.f32 0.0, %v1001
      %v1003 = vpop.f32.mrb[0].mxu0
      %v1004 = vadd.f32 0.0, %v1003
      %v1005 = vpop.f32.mrb[0].mxu0
      %v1006 = vadd.f32 0.0, %v1005
      %v1007 = vpop.f32.mrb[0].mxu0
      %v1008 = vadd.f32 0.0, %v1007
      %1009 = vmatprep.mubr.bf16.mxu0 0
      %1010 = vmatmul.mubr.bf16.gmra.mrb[0].mxu0 %v857
      %v1011 = vpop.f32.mrb[0].mxu0
      %v1012 = vadd.f32 0.0, %v1011
      %v1013 = vpop.f32.mrb[0].mxu0
      %v1014 = vadd.f32 0.0, %v1013
      %v1015 = vpop.f32.mrb[0].mxu0
      %v1016 = vadd.f32 0.0, %v1015
      %v1017 = vpop.f32.mrb[0].mxu0
      %v1018 = vadd.f32 0.0, %v1017
      %1019 = vmatprep.mubr.bf16.mxu0 0
      %1020 = vmatmul.mubr.bf16.gmra.mrb[0].mxu0 %v858
      %v1021 = vpop.f32.mrb[0].mxu0
      %v1022 = vadd.f32 0.0, %v1021
      %v1023 = vpop.f32.mrb[0].mxu0
      %v1024 = vadd.f32 0.0, %v1023
      %v1025 = vpop.f32.mrb[0].mxu0
      %v1026 = vadd.f32 0.0, %v1025
      %v1027 = vpop.f32.mrb[0].mxu0
      %v1028 = vadd.f32 0.0, %v1027
      %1029 = vmatprep.mubr.bf16.mxu0 0
      %1030 = vmatmul.mubr.bf16.gmra.mrb[0].mxu0 %v859
      %v1031 = vpop.f32.mrb[0].mxu0
      %v1032 = vadd.f32 0.0, %v1031
      %v1033 = vpop.f32.mrb[0].mxu0
      %v1034 = vadd.f32 0.0, %v1033
      %v1035 = vpop.f32.mrb[0].mxu0
      %v1036 = vadd.f32 0.0, %v1035
      %v1037 = vpop.f32.mrb[0].mxu0
      %v1038 = vadd.f32 0.0, %v1037
      %1039 = vmatprep.mubr.bf16.mxu0 0
      %1040 = vmatmul.mubr.bf16.gmra.mrb[0].mxu0 %v860
      %v1041 = vpop.f32.mrb[0].mxu0
      %v1042 = vadd.f32 0.0, %v1041
      %v1043 = vpop.f32.mrb[0].mxu0
      %v1044 = vadd.f32 0.0, %v1043
      %v1045 = vpop.f32.mrb[0].mxu0
      %v1046 = vadd.f32 0.0, %v1045
      %v1047 = vpop.f32.mrb[0].mxu0
      %v1048 = vadd.f32 0.0, %v1047
      %1049 = vmatprep.mubr.bf16.mxu0 0
      %1050 = vmatmul.mubr.bf16.gmra.mrb[0].mxu0 %v861
      %v1051 = vpop.f32.mrb[0].mxu0
      %v1052 = vadd.f32 0.0, %v1051
      %v1053 = vpop.f32.mrb[0].mxu0
      %v1054 = vadd.f32 0.0, %v1053
      %v1055 = vpop.f32.mrb[0].mxu0
      %v1056 = vadd.f32 0.0, %v1055
      %v1057 = vpop.f32.mrb[0].mxu0
      %v1058 = vadd.f32 0.0, %v1057
      %1059 = vmatprep.mubr.bf16.mxu0 0
      %1060 = vmatmul.mubr.bf16.gmra.mrb[0].mxu0 %v862
      %v1061 = vpop.f32.mrb[0].mxu0
      %v1062 = vadd.f32 0.0, %v1061
      %v1063 = vpop.f32.mrb[0].mxu0
      %v1064 = vadd.f32 0.0, %v1063
      %v1065 = vpop.f32.mrb[0].mxu0
      %v1066 = vadd.f32 0.0, %v1065
      %v1067 = vpop.f32.mrb[0].mxu0
      %v1068 = vadd.f32 0.0, %v1067
      %1069 = vmatprep.mubr.bf16.mxu0 0
      %1070 = vmatmul.mubr.bf16.gmra.mrb[0].mxu0 %v863
      %v1071 = vpop.f32.mrb[0].mxu0
      %v1072 = vadd.f32 0.0, %v1071
      %v1073 = vpop.f32.mrb[0].mxu0
      %v1074 = vadd.f32 0.0, %v1073
      %v1075 = vpop.f32.mrb[0].mxu0
      %v1076 = vadd.f32 0.0, %v1075
      %v1077 = vpop.f32.mrb[0].mxu0
      %v1078 = vadd.f32 0.0, %v1077
      %1079 = vmatprep.mubr.bf16.mxu0 0
      %1080 = vmatmul.mubr.bf16.gmra.mrb[0].mxu0 %v864
      %v1081 = vpop.f32.mrb[0].mxu0
      %v1082 = vadd.f32 0.0, %v1081
      %v1083 = vpop.f32.mrb[0].mxu0
      %v1084 = vadd.f32 0.0, %v1083
      %v1085 = vpop.f32.mrb[0].mxu0
      %v1086 = vadd.f32 0.0, %v1085
      %v1087 = vpop.f32.mrb[0].mxu0
      %v1088 = vadd.f32 0.0, %v1087
      %1089 = vdwg.mxu0
      %v1090 = vmax.f32 %v932, %v934
      %1091 = vmax.xlane.f32.xlu0 %v1090
      %v1092 = vpop.xlane.xlu0 %1091
      %v1093 = vmax.f32 %v936, %v938
      %1094 = vmax.xlane.f32.xlu0 %v1093
      %v1095 = vpop.xlane.xlu0 %1094
      %v1096 = vmax.f32 %v942, %v944
      %1097 = vmax.xlane.f32.xlu0 %v1096
      %v1098 = vpop.xlane.xlu0 %1097
      %v1099 = vmax.f32 %v946, %v948
      %1100 = vmax.xlane.f32.xlu0 %v1099
      %v1101 = vpop.xlane.xlu0 %1100
      %v1102 = vmax.f32 %v952, %v954
      %1103 = vmax.xlane.f32.xlu0 %v1102
      %v1104 = vpop.xlane.xlu0 %1103
      %v1105 = vmax.f32 %v956, %v958
      %1106 = vmax.xlane.f32.xlu0 %v1105
      %v1107 = vpop.xlane.xlu0 %1106
      %v1108 = vmax.f32 %v962, %v964
      %1109 = vmax.xlane.f32.xlu0 %v1108
      %v1110 = vpop.xlane.xlu0 %1109
      %v1111 = vmax.f32 %v966, %v968
      %1112 = vmax.xlane.f32.xlu0 %v1111
      %v1113 = vpop.xlane.xlu0 %1112
      %v1114 = vmax.f32 %v972, %v974
      %1115 = vmax.xlane.f32.xlu0 %v1114
      %v1116 = vpop.xlane.xlu0 %1115
      %v1117 = vmax.f32 %v976, %v978
      %1118 = vmax.xlane.f32.xlu0 %v1117
      %v1119 = vpop.xlane.xlu0 %1118
      %v1120 = vmax.f32 %v982, %v984
      %1121 = vmax.xlane.f32.xlu0 %v1120
      %v1122 = vpop.xlane.xlu0 %1121
      %v1123 = vmax.f32 %v986, %v988
      %1124 = vmax.xlane.f32.xlu0 %v1123
      %v1125 = vpop.xlane.xlu0 %1124
      %v1126 = vmax.f32 %v992, %v994
      %1127 = vmax.xlane.f32.xlu0 %v1126
      %v1128 = vpop.xlane.xlu0 %1127
      %v1129 = vmax.f32 %v996, %v998
      %1130 = vmax.xlane.f32.xlu0 %v1129
      %v1131 = vpop.xlane.xlu0 %1130
      %v1132 = vmax.f32 %v1002, %v1004
      %1133 = vmax.xlane.f32.xlu0 %v1132
      %v1134 = vpop.xlane.xlu0 %1133
      %v1135 = vmax.f32 %v1006, %v1008
      %1136 = vmax.xlane.f32.xlu0 %v1135
      %v1137 = vpop.xlane.xlu0 %1136
      %v1138 = vmax.f32 %v1012, %v1014
      %1139 = vmax.xlane.f32.xlu0 %v1138
      %v1140 = vpop.xlane.xlu0 %1139
      %v1141 = vmax.f32 %v1016, %v1018
      %1142 = vmax.xlane.f32.xlu0 %v1141
      %v1143 = vpop.xlane.xlu0 %1142
      %v1144 = vmax.f32 %v1022, %v1024
      %1145 = vmax.xlane.f32.xlu0 %v1144
      %v1146 = vpop.xlane.xlu0 %1145
      %v1147 = vmax.f32 %v1026, %v1028
      %1148 = vmax.xlane.f32.xlu0 %v1147
      %v1149 = vpop.xlane.xlu0 %1148
      %v1150 = vmax.f32 %v1032, %v1034
      %1151 = vmax.xlane.f32.xlu0 %v1150
      %v1152 = vpop.xlane.xlu0 %1151
      %v1153 = vmax.f32 %v1036, %v1038
      %1154 = vmax.xlane.f32.xlu0 %v1153
      %v1155 = vpop.xlane.xlu0 %1154
      %v1156 = vmax.f32 %v1042, %v1044
      %1157 = vmax.xlane.f32.xlu0 %v1156
      %v1158 = vpop.xlane.xlu0 %1157
      %v1159 = vmax.f32 %v1046, %v1048
      %1160 = vmax.xlane.f32.xlu0 %v1159
      %v1161 = vpop.xlane.xlu0 %1160
      %v1162 = vmax.f32 %v1052, %v1054
      %1163 = vmax.xlane.f32.xlu0 %v1162
      %v1164 = vpop.xlane.xlu0 %1163
      %v1165 = vmax.f32 %v1056, %v1058
      %1166 = vmax.xlane.f32.xlu0 %v1165
      %v1167 = vpop.xlane.xlu0 %1166
      %v1168 = vmax.f32 %v1062, %v1064
      %1169 = vmax.xlane.f32.xlu0 %v1168
      %v1170 = vpop.xlane.xlu0 %1169
      %v1171 = vmax.f32 %v1066, %v1068
      %1172 = vmax.xlane.f32.xlu0 %v1171
      %v1173 = vpop.xlane.xlu0 %1172
      %v1174 = vmax.f32 %v1072, %v1074
      %1175 = vmax.xlane.f32.xlu0 %v1174
      %v1176 = vpop.xlane.xlu0 %1175
      %v1177 = vmax.f32 %v1076, %v1078
      %1178 = vmax.xlane.f32.xlu0 %v1177
      %v1179 = vpop.xlane.xlu0 %1178
      %v1180 = vmax.f32 %v1082, %v1084
      %1181 = vmax.xlane.f32.xlu0 %v1180
      %v1182 = vpop.xlane.xlu0 %1181
      %v1183 = vmax.f32 %v1086, %v1088
      %1184 = vmax.xlane.f32.xlu0 %v1183
      %v1185 = vpop.xlane.xlu0 %1184
      %v1186 = vsub.f32 %v932, %v1092
      %v1187 = vsub.f32 %v934, %v1092
      %v1188 = vsub.f32 %v936, %v1095
      %v1189 = vsub.f32 %v938, %v1095
      %v1190 = vsub.f32 %v942, %v1098
      %v1191 = vsub.f32 %v944, %v1098
      %v1192 = vsub.f32 %v946, %v1101
      %v1193 = vsub.f32 %v948, %v1101
      %v1194 = vsub.f32 %v952, %v1104
      %v1195 = vsub.f32 %v954, %v1104
      %v1196 = vsub.f32 %v956, %v1107
      %v1197 = vsub.f32 %v958, %v1107
      %v1198 = vsub.f32 %v962, %v1110
      %v1199 = vsub.f32 %v964, %v1110
      %v1200 = vsub.f32 %v966, %v1113
      %v1201 = vsub.f32 %v968, %v1113
      %v1202 = vsub.f32 %v972, %v1116
      %v1203 = vsub.f32 %v974, %v1116
      %v1204 = vsub.f32 %v976, %v1119
      %v1205 = vsub.f32 %v978, %v1119
      %v1206 = vsub.f32 %v982, %v1122
      %v1207 = vsub.f32 %v984, %v1122
      %v1208 = vsub.f32 %v986, %v1125
      %v1209 = vsub.f32 %v988, %v1125
      %v1210 = vsub.f32 %v992, %v1128
      %v1211 = vsub.f32 %v994, %v1128
      %v1212 = vsub.f32 %v996, %v1131
      %v1213 = vsub.f32 %v998, %v1131
      %v1214 = vsub.f32 %v1002, %v1134
      %v1215 = vsub.f32 %v1004, %v1134
      %v1216 = vsub.f32 %v1006, %v1137
      %v1217 = vsub.f32 %v1008, %v1137
      %v1218 = vsub.f32 %v1012, %v1140
      %v1219 = vsub.f32 %v1014, %v1140
      %v1220 = vsub.f32 %v1016, %v1143
      %v1221 = vsub.f32 %v1018, %v1143
      %v1222 = vsub.f32 %v1022, %v1146
      %v1223 = vsub.f32 %v1024, %v1146
      %v1224 = vsub.f32 %v1026, %v1149
      %v1225 = vsub.f32 %v1028, %v1149
      %v1226 = vsub.f32 %v1032, %v1152
      %v1227 = vsub.f32 %v1034, %v1152
      %v1228 = vsub.f32 %v1036, %v1155
      %v1229 = vsub.f32 %v1038, %v1155
      %v1230 = vsub.f32 %v1042, %v1158
      %v1231 = vsub.f32 %v1044, %v1158
      %v1232 = vsub.f32 %v1046, %v1161
      %v1233 = vsub.f32 %v1048, %v1161
      %v1234 = vsub.f32 %v1052, %v1164
      %v1235 = vsub.f32 %v1054, %v1164
      %v1236 = vsub.f32 %v1056, %v1167
      %v1237 = vsub.f32 %v1058, %v1167
      %v1238 = vsub.f32 %v1062, %v1170
      %v1239 = vsub.f32 %v1064, %v1170
      %v1240 = vsub.f32 %v1066, %v1173
      %v1241 = vsub.f32 %v1068, %v1173
      %v1242 = vsub.f32 %v1072, %v1176
      %v1243 = vsub.f32 %v1074, %v1176
      %v1244 = vsub.f32 %v1076, %v1179
      %v1245 = vsub.f32 %v1078, %v1179
      %v1246 = vsub.f32 %v1082, %v1182
      %v1247 = vsub.f32 %v1084, %v1182
      %v1248 = vsub.f32 %v1086, %v1185
      %v1249 = vsub.f32 %v1088, %v1185
      %v1250 = vmul.f32 %v1186, 1.442695
      %v1251 = vpow.pop %v1250
      %v1252 = vmul.f32 %v1187, 1.442695
      %v1253 = vpow.pop %v1252
      %v1254 = vmul.f32 %v1188, 1.442695
      %v1255 = vpow.pop %v1254
      %v1256 = vmul.f32 %v1189, 1.442695
      %v1257 = vpow.pop %v1256
      %v1258 = vmul.f32 %v1190, 1.442695
      %v1259 = vpow.pop %v1258
      %v1260 = vmul.f32 %v1191, 1.442695
      %v1261 = vpow.pop %v1260
      %v1262 = vmul.f32 %v1192, 1.442695
      %v1263 = vpow.pop %v1262
      %v1264 = vmul.f32 %v1193, 1.442695
      %v1265 = vpow.pop %v1264
      %v1266 = vmul.f32 %v1194, 1.442695
      %v1267 = vpow.pop %v1266
      %v1268 = vmul.f32 %v1195, 1.442695
      %v1269 = vpow.pop %v1268
      %v1270 = vmul.f32 %v1196, 1.442695
      %v1271 = vpow.pop %v1270
      %v1272 = vmul.f32 %v1197, 1.442695
      %v1273 = vpow.pop %v1272
      %v1274 = vmul.f32 %v1198, 1.442695
      %v1275 = vpow.pop %v1274
      %v1276 = vmul.f32 %v1199, 1.442695
      %v1277 = vpow.pop %v1276
      %v1278 = vmul.f32 %v1200, 1.442695
      %v1279 = vpow.pop %v1278
      %v1280 = vmul.f32 %v1201, 1.442695
      %v1281 = vpow.pop %v1280
      %v1282 = vmul.f32 %v1202, 1.442695
      %v1283 = vpow.pop %v1282
      %v1284 = vmul.f32 %v1203, 1.442695
      %v1285 = vpow.pop %v1284
      %v1286 = vmul.f32 %v1204, 1.442695
      %v1287 = vpow.pop %v1286
      %v1288 = vmul.f32 %v1205, 1.442695
      %v1289 = vpow.pop %v1288
      %v1290 = vmul.f32 %v1206, 1.442695
      %v1291 = vpow.pop %v1290
      %v1292 = vmul.f32 %v1207, 1.442695
      %v1293 = vpow.pop %v1292
      %v1294 = vmul.f32 %v1208, 1.442695
      %v1295 = vpow.pop %v1294
      %v1296 = vmul.f32 %v1209, 1.442695
      %v1297 = vpow.pop %v1296
      %v1298 = vmul.f32 %v1210, 1.442695
      %v1299 = vpow.pop %v1298
      %v1300 = vmul.f32 %v1211, 1.442695
      %v1301 = vpow.pop %v1300
      %v1302 = vmul.f32 %v1212, 1.442695
      %v1303 = vpow.pop %v1302
      %v1304 = vmul.f32 %v1213, 1.442695
      %v1305 = vpow.pop %v1304
      %v1306 = vmul.f32 %v1214, 1.442695
      %v1307 = vpow.pop %v1306
      %v1308 = vmul.f32 %v1215, 1.442695
      %v1309 = vpow.pop %v1308
      %v1310 = vmul.f32 %v1216, 1.442695
      %v1311 = vpow.pop %v1310
      %v1312 = vmul.f32 %v1217, 1.442695
      %v1313 = vpow.pop %v1312
      %v1314 = vmul.f32 %v1218, 1.442695
      %v1315 = vpow.pop %v1314
      %v1316 = vmul.f32 %v1219, 1.442695
      %v1317 = vpow.pop %v1316
      %v1318 = vmul.f32 %v1220, 1.442695
      %v1319 = vpow.pop %v1318
      %v1320 = vmul.f32 %v1221, 1.442695
      %v1321 = vpow.pop %v1320
      %v1322 = vmul.f32 %v1222, 1.442695
      %v1323 = vpow.pop %v1322
      %v1324 = vmul.f32 %v1223, 1.442695
      %v1325 = vpow.pop %v1324
      %v1326 = vmul.f32 %v1224, 1.442695
      %v1327 = vpow.pop %v1326
      %v1328 = vmul.f32 %v1225, 1.442695
      %v1329 = vpow.pop %v1328
      %v1330 = vmul.f32 %v1226, 1.442695
      %v1331 = vpow.pop %v1330
      %v1332 = vmul.f32 %v1227, 1.442695
      %v1333 = vpow.pop %v1332
      %v1334 = vmul.f32 %v1228, 1.442695
      %v1335 = vpow.pop %v1334
      %v1336 = vmul.f32 %v1229, 1.442695
      %v1337 = vpow.pop %v1336
      %v1338 = vmul.f32 %v1230, 1.442695
      %v1339 = vpow.pop %v1338
      %v1340 = vmul.f32 %v1231, 1.442695
      %v1341 = vpow.pop %v1340
      %v1342 = vmul.f32 %v1232, 1.442695
      %v1343 = vpow.pop %v1342
      %v1344 = vmul.f32 %v1233, 1.442695
      %v1345 = vpow.pop %v1344
      %v1346 = vmul.f32 %v1234, 1.442695
      %v1347 = vpow.pop %v1346
      %v1348 = vmul.f32 %v1235, 1.442695
      %v1349 = vpow.pop %v1348
      %v1350 = vmul.f32 %v1236, 1.442695
      %v1351 = vpow.pop %v1350
      %v1352 = vmul.f32 %v1237, 1.442695
      %v1353 = vpow.pop %v1352
      %v1354 = vmul.f32 %v1238, 1.442695
      %v1355 = vpow.pop %v1354
      %v1356 = vmul.f32 %v1239, 1.442695
      %v1357 = vpow.pop %v1356
      %v1358 = vmul.f32 %v1240, 1.442695
      %v1359 = vpow.pop %v1358
      %v1360 = vmul.f32 %v1241, 1.442695
      %v1361 = vpow.pop %v1360
      %v1362 = vmul.f32 %v1242, 1.442695
      %v1363 = vpow.pop %v1362
      %v1364 = vmul.f32 %v1243, 1.442695
      %v1365 = vpow.pop %v1364
      %v1366 = vmul.f32 %v1244, 1.442695
      %v1367 = vpow.pop %v1366
      %v1368 = vmul.f32 %v1245, 1.442695
      %v1369 = vpow.pop %v1368
      %v1370 = vmul.f32 %v1246, 1.442695
      %v1371 = vpow.pop %v1370
      %v1372 = vmul.f32 %v1247, 1.442695
      %v1373 = vpow.pop %v1372
      %v1374 = vmul.f32 %v1248, 1.442695
      %v1375 = vpow.pop %v1374
      %v1376 = vmul.f32 %v1249, 1.442695
      %v1377 = vpow.pop %v1376
      %v1378 = vadd.f32 %v1251, %v1253
      %1379 = vadd.xlane.f32.xlu0 %v1378
      %v1380 = vpop.xlane.xlu0 %1379
      %v1381 = vadd.f32 %v1255, %v1257
      %1382 = vadd.xlane.f32.xlu0 %v1381
      %v1383 = vpop.xlane.xlu0 %1382
      %v1384 = vadd.f32 %v1259, %v1261
      %1385 = vadd.xlane.f32.xlu0 %v1384
      %v1386 = vpop.xlane.xlu0 %1385
      %v1387 = vadd.f32 %v1263, %v1265
      %1388 = vadd.xlane.f32.xlu0 %v1387
      %v1389 = vpop.xlane.xlu0 %1388
      %v1390 = vadd.f32 %v1267, %v1269
      %1391 = vadd.xlane.f32.xlu0 %v1390
      %v1392 = vpop.xlane.xlu0 %1391
      %v1393 = vadd.f32 %v1271, %v1273
      %1394 = vadd.xlane.f32.xlu0 %v1393
      %v1395 = vpop.xlane.xlu0 %1394
      %v1396 = vadd.f32 %v1275, %v1277
      %1397 = vadd.xlane.f32.xlu0 %v1396
      %v1398 = vpop.xlane.xlu0 %1397
      %v1399 = vadd.f32 %v1279, %v1281
      %1400 = vadd.xlane.f32.xlu0 %v1399
      %v1401 = vpop.xlane.xlu0 %1400
      %v1402 = vadd.f32 %v1283, %v1285
      %1403 = vadd.xlane.f32.xlu0 %v1402
      %v1404 = vpop.xlane.xlu0 %1403
      %v1405 = vadd.f32 %v1287, %v1289
      %1406 = vadd.xlane.f32.xlu0 %v1405
      %v1407 = vpop.xlane.xlu0 %1406
      %v1408 = vadd.f32 %v1291, %v1293
      %1409 = vadd.xlane.f32.xlu0 %v1408
      %v1410 = vpop.xlane.xlu0 %1409
      %v1411 = vadd.f32 %v1295, %v1297
      %1412 = vadd.xlane.f32.xlu0 %v1411
      %v1413 = vpop.xlane.xlu0 %1412
      %v1414 = vadd.f32 %v1299, %v1301
      %1415 = vadd.xlane.f32.xlu0 %v1414
      %v1416 = vpop.xlane.xlu0 %1415
      %v1417 = vadd.f32 %v1303, %v1305
      %1418 = vadd.xlane.f32.xlu0 %v1417
      %v1419 = vpop.xlane.xlu0 %1418
      %v1420 = vadd.f32 %v1307, %v1309
      %1421 = vadd.xlane.f32.xlu0 %v1420
      %v1422 = vpop.xlane.xlu0 %1421
      %v1423 = vadd.f32 %v1311, %v1313
      %1424 = vadd.xlane.f32.xlu0 %v1423
      %v1425 = vpop.xlane.xlu0 %1424
      %v1426 = vadd.f32 %v1315, %v1317
      %1427 = vadd.xlane.f32.xlu0 %v1426
      %v1428 = vpop.xlane.xlu0 %1427
      %v1429 = vadd.f32 %v1319, %v1321
      %1430 = vadd.xlane.f32.xlu0 %v1429
      %v1431 = vpop.xlane.xlu0 %1430
      %v1432 = vadd.f32 %v1323, %v1325
      %1433 = vadd.xlane.f32.xlu0 %v1432
      %v1434 = vpop.xlane.xlu0 %1433
      %v1435 = vadd.f32 %v1327, %v1329
      %1436 = vadd.xlane.f32.xlu0 %v1435
      %v1437 = vpop.xlane.xlu0 %1436
      %v1438 = vadd.f32 %v1331, %v1333
      %1439 = vadd.xlane.f32.xlu0 %v1438
      %v1440 = vpop.xlane.xlu0 %1439
      %v1441 = vadd.f32 %v1335, %v1337
      %1442 = vadd.xlane.f32.xlu0 %v1441
      %v1443 = vpop.xlane.xlu0 %1442
      %v1444 = vadd.f32 %v1339, %v1341
      %1445 = vadd.xlane.f32.xlu0 %v1444
      %v1446 = vpop.xlane.xlu0 %1445
      %v1447 = vadd.f32 %v1343, %v1345
      %1448 = vadd.xlane.f32.xlu0 %v1447
      %v1449 = vpop.xlane.xlu0 %1448
      %v1450 = vadd.f32 %v1347, %v1349
      %1451 = vadd.xlane.f32.xlu0 %v1450
      %v1452 = vpop.xlane.xlu0 %1451
      %v1453 = vadd.f32 %v1351, %v1353
      %1454 = vadd.xlane.f32.xlu0 %v1453
      %v1455 = vpop.xlane.xlu0 %1454
      %v1456 = vadd.f32 %v1355, %v1357
      %1457 = vadd.xlane.f32.xlu0 %v1456
      %v1458 = vpop.xlane.xlu0 %1457
      %v1459 = vadd.f32 %v1359, %v1361
      %1460 = vadd.xlane.f32.xlu0 %v1459
      %v1461 = vpop.xlane.xlu0 %1460
      %v1462 = vadd.f32 %v1363, %v1365
      %1463 = vadd.xlane.f32.xlu0 %v1462
      %v1464 = vpop.xlane.xlu0 %1463
      %v1465 = vadd.f32 %v1367, %v1369
      %1466 = vadd.xlane.f32.xlu0 %v1465
      %v1467 = vpop.xlane.xlu0 %1466
      %v1468 = vadd.f32 %v1371, %v1373
      %1469 = vadd.xlane.f32.xlu0 %v1468
      %v1470 = vpop.xlane.xlu0 %1469
      %v1471 = vadd.f32 %v1375, %v1377
      %1472 = vadd.xlane.f32.xlu0 %v1471
      %v1473 = vpop.xlane.xlu0 %1472
      %v1474 = vpack.c.bf16 %v1255, %v1251
      %v1475 = vpack.c.bf16 %v1257, %v1253
      %v1476 = vpack.c.bf16 %v1263, %v1259
      %v1477 = vpack.c.bf16 %v1265, %v1261
      %v1478 = vpack.c.bf16 %v1271, %v1267
      %v1479 = vpack.c.bf16 %v1273, %v1269
      %v1480 = vpack.c.bf16 %v1279, %v1275
      %v1481 = vpack.c.bf16 %v1281, %v1277
      %v1482 = vpack.c.bf16 %v1287, %v1283
      %v1483 = vpack.c.bf16 %v1289, %v1285
      %v1484 = vpack.c.bf16 %v1295, %v1291
      %v1485 = vpack.c.bf16 %v1297, %v1293
      %v1486 = vpack.c.bf16 %v1303, %v1299
      %v1487 = vpack.c.bf16 %v1305, %v1301
      %v1488 = vpack.c.bf16 %v1311, %v1307
      %v1489 = vpack.c.bf16 %v1313, %v1309
      %v1490 = vpack.c.bf16 %v1319, %v1315
      %v1491 = vpack.c.bf16 %v1321, %v1317
      %v1492 = vpack.c.bf16 %v1327, %v1323
      %v1493 = vpack.c.bf16 %v1329, %v1325
      %v1494 = vpack.c.bf16 %v1335, %v1331
      %v1495 = vpack.c.bf16 %v1337, %v1333
      %v1496 = vpack.c.bf16 %v1343, %v1339
      %v1497 = vpack.c.bf16 %v1345, %v1341
      %v1498 = vpack.c.bf16 %v1351, %v1347
      %v1499 = vpack.c.bf16 %v1353, %v1349
      %v1500 = vpack.c.bf16 %v1359, %v1355
      %v1501 = vpack.c.bf16 %v1361, %v1357
      %v1502 = vpack.c.bf16 %v1367, %v1363
      %v1503 = vpack.c.bf16 %v1369, %v1365
      %v1504 = vpack.c.bf16 %v1375, %v1371
      %v1505 = vpack.c.bf16 %v1377, %v1373
      %1506 = vmatprep.subr.bf16.mxu0 0
      %1507 = vmatpush1.bf16.msra.mxu0 %v881
      %1508 = vmatprep.subr.bf16.mxu0 0
      %1509 = vmatpush1.bf16.msra.mxu0 %v882
      %1510 = vmatprep.subr.bf16.mxu0 0
      %1511 = vmatpush1.bf16.msra.mxu0 %v883
      %1512 = vmatprep.subr.bf16.mxu0 0
      %1513 = vmatpush1.bf16.msra.mxu0 %v884
      %1514 = vmatprep.subr.bf16.mxu0 0
      %1515 = vmatpush1.bf16.msra.mxu0 %v885
      %1516 = vmatprep.subr.bf16.mxu0 0
      %1517 = vmatpush1.bf16.msra.mxu0 %v886
      %1518 = vmatprep.subr.bf16.mxu0 0
      %1519 = vmatpush1.bf16.msra.mxu0 %v887
      %1520 = vmatprep.subr.bf16.mxu0 0
      %1521 = vmatpush1.bf16.msra.mxu0 %v888
      %1522 = vmatprep.subr.bf16.mxu0 0
      %1523 = vmatpush1.bf16.msra.mxu0 %v889
      %1524 = vmatprep.subr.bf16.mxu0 0
      %1525 = vmatpush1.bf16.msra.mxu0 %v890
      %1526 = vmatprep.subr.bf16.mxu0 0
      %1527 = vmatpush1.bf16.msra.mxu0 %v891
      %1528 = vmatprep.subr.bf16.mxu0 0
      %1529 = vmatpush1.bf16.msra.mxu0 %v892
      %1530 = vmatprep.subr.bf16.mxu0 0
      %1531 = vmatpush1.bf16.msra.mxu0 %v893
      %1532 = vmatprep.subr.bf16.mxu0 0
      %1533 = vmatpush1.bf16.msra.mxu0 %v894
      %1534 = vmatprep.subr.bf16.mxu0 0
      %1535 = vmatpush1.bf16.msra.mxu0 %v895
      %1536 = vmatprep.subr.bf16.mxu0 0
      %1537 = vmatpush1.bf16.msra.mxu0 %v896
      %1538 = vmatprep.mubr.bf16.mxu0 %v1475
      %1539 = vmatmul.mubr.bf16.gmra.mrb[0].mxu0 %v1474
      %v1540 = vpop.f32.mrb[0].mxu0
      %v1541 = vadd.f32 0.0, %v1540
      %v1542 = vpop.f32.mrb[0].mxu0
      %v1543 = vpop.f32.mrb[0].mxu0
      %v1544 = vadd.f32 0.0, %v1543
      %v1545 = vpop.f32.mrb[0].mxu0
      %1546 = vmatprep.mubr.bf16.mxu0 %v1477
      %1547 = vmatmul.mubr.bf16.gmra.mrb[0].mxu0 %v1476
      %v1548 = vpop.f32.mrb[0].mxu0
      %v1549 = vadd.f32 0.0, %v1548
      %v1550 = vpop.f32.mrb[0].mxu0
      %v1551 = vpop.f32.mrb[0].mxu0
      %v1552 = vadd.f32 0.0, %v1551
      %v1553 = vpop.f32.mrb[0].mxu0
      %1554 = vmatprep.mubr.bf16.mxu0 %v1479
      %1555 = vmatmul.mubr.bf16.gmra.mrb[0].mxu0 %v1478
      %v1556 = vpop.f32.mrb[0].mxu0
      %v1557 = vadd.f32 0.0, %v1556
      %v1558 = vpop.f32.mrb[0].mxu0
      %v1559 = vpop.f32.mrb[0].mxu0
      %v1560 = vadd.f32 0.0, %v1559
      %v1561 = vpop.f32.mrb[0].mxu0
      %1562 = vmatprep.mubr.bf16.mxu0 %v1481
      %1563 = vmatmul.mubr.bf16.gmra.mrb[0].mxu0 %v1480
      %v1564 = vpop.f32.mrb[0].mxu0
      %v1565 = vadd.f32 0.0, %v1564
      %v1566 = vpop.f32.mrb[0].mxu0
      %v1567 = vpop.f32.mrb[0].mxu0
      %v1568 = vadd.f32 0.0, %v1567
      %v1569 = vpop.f32.mrb[0].mxu0
      %1570 = vmatprep.mubr.bf16.mxu0 %v1483
      %1571 = vmatmul.mubr.bf16.gmra.mrb[0].mxu0 %v1482
      %v1572 = vpop.f32.mrb[0].mxu0
      %v1573 = vadd.f32 0.0, %v1572
      %v1574 = vpop.f32.mrb[0].mxu0
      %v1575 = vpop.f32.mrb[0].mxu0
      %v1576 = vadd.f32 0.0, %v1575
      %v1577 = vpop.f32.mrb[0].mxu0
      %1578 = vmatprep.mubr.bf16.mxu0 %v1485
      %1579 = vmatmul.mubr.bf16.gmra.mrb[0].mxu0 %v1484
      %v1580 = vpop.f32.mrb[0].mxu0
      %v1581 = vadd.f32 0.0, %v1580
      %v1582 = vpop.f32.mrb[0].mxu0
      %v1583 = vpop.f32.mrb[0].mxu0
      %v1584 = vadd.f32 0.0, %v1583
      %v1585 = vpop.f32.mrb[0].mxu0
      %1586 = vmatprep.mubr.bf16.mxu0 %v1487
      %1587 = vmatmul.mubr.bf16.gmra.mrb[0].mxu0 %v1486
      %v1588 = vpop.f32.mrb[0].mxu0
      %v1589 = vadd.f32 0.0, %v1588
      %v1590 = vpop.f32.mrb[0].mxu0
      %v1591 = vpop.f32.mrb[0].mxu0
      %v1592 = vadd.f32 0.0, %v1591
      %v1593 = vpop.f32.mrb[0].mxu0
      %1594 = vmatprep.mubr.bf16.mxu0 %v1489
      %1595 = vmatmul.mubr.bf16.gmra.mrb[0].mxu0 %v1488
      %v1596 = vpop.f32.mrb[0].mxu0
      %v1597 = vadd.f32 0.0, %v1596
      %v1598 = vpop.f32.mrb[0].mxu0
      %v1599 = vpop.f32.mrb[0].mxu0
      %v1600 = vadd.f32 0.0, %v1599
      %v1601 = vpop.f32.mrb[0].mxu0
      %1602 = vmatprep.mubr.bf16.mxu0 %v1491
      %1603 = vmatmul.mubr.bf16.gmra.mrb[0].mxu0 %v1490
      %v1604 = vpop.f32.mrb[0].mxu0
      %v1605 = vadd.f32 0.0, %v1604
      %v1606 = vpop.f32.mrb[0].mxu0
      %v1607 = vpop.f32.mrb[0].mxu0
      %v1608 = vadd.f32 0.0, %v1607
      %v1609 = vpop.f32.mrb[0].mxu0
      %1610 = vmatprep.mubr.bf16.mxu0 %v1493
      %1611 = vmatmul.mubr.bf16.gmra.mrb[0].mxu0 %v1492
      %v1612 = vpop.f32.mrb[0].mxu0
      %v1613 = vadd.f32 0.0, %v1612
      %v1614 = vpop.f32.mrb[0].mxu0
      %v1615 = vpop.f32.mrb[0].mxu0
      %v1616 = vadd.f32 0.0, %v1615
      %v1617 = vpop.f32.mrb[0].mxu0
      %1618 = vmatprep.mubr.bf16.mxu0 %v1495
      %1619 = vmatmul.mubr.bf16.gmra.mrb[0].mxu0 %v1494
      %v1620 = vpop.f32.mrb[0].mxu0
      %v1621 = vadd.f32 0.0, %v1620
      %v1622 = vpop.f32.mrb[0].mxu0
      %v1623 = vpop.f32.mrb[0].mxu0
      %v1624 = vadd.f32 0.0, %v1623
      %v1625 = vpop.f32.mrb[0].mxu0
      %1626 = vmatprep.mubr.bf16.mxu0 %v1497
      %1627 = vmatmul.mubr.bf16.gmra.mrb[0].mxu0 %v1496
      %v1628 = vpop.f32.mrb[0].mxu0
      %v1629 = vadd.f32 0.0, %v1628
      %v1630 = vpop.f32.mrb[0].mxu0
      %v1631 = vpop.f32.mrb[0].mxu0
      %v1632 = vadd.f32 0.0, %v1631
      %v1633 = vpop.f32.mrb[0].mxu0
      %1634 = vmatprep.mubr.bf16.mxu0 %v1499
      %1635 = vmatmul.mubr.bf16.gmra.mrb[0].mxu0 %v1498
      %v1636 = vpop.f32.mrb[0].mxu0
      %v1637 = vadd.f32 0.0, %v1636
      %v1638 = vpop.f32.mrb[0].mxu0
      %v1639 = vpop.f32.mrb[0].mxu0
      %v1640 = vadd.f32 0.0, %v1639
      %v1641 = vpop.f32.mrb[0].mxu0
      %1642 = vmatprep.mubr.bf16.mxu0 %v1501
      %1643 = vmatmul.mubr.bf16.gmra.mrb[0].mxu0 %v1500
      %v1644 = vpop.f32.mrb[0].mxu0
      %v1645 = vadd.f32 0.0, %v1644
      %v1646 = vpop.f32.mrb[0].mxu0
      %v1647 = vpop.f32.mrb[0].mxu0
      %v1648 = vadd.f32 0.0, %v1647
      %v1649 = vpop.f32.mrb[0].mxu0
      %1650 = vmatprep.mubr.bf16.mxu0 %v1503
      %1651 = vmatmul.mubr.bf16.gmra.mrb[0].mxu0 %v1502
      %v1652 = vpop.f32.mrb[0].mxu0
      %v1653 = vadd.f32 0.0, %v1652
      %v1654 = vpop.f32.mrb[0].mxu0
      %v1655 = vpop.f32.mrb[0].mxu0
      %v1656 = vadd.f32 0.0, %v1655
      %v1657 = vpop.f32.mrb[0].mxu0
      %1658 = vmatprep.mubr.bf16.mxu0 %v1505
      %1659 = vmatmul.mubr.bf16.gmra.mrb[0].mxu0 %v1504
      %v1660 = vpop.f32.mrb[0].mxu0
      %v1661 = vadd.f32 0.0, %v1660
      %v1662 = vpop.f32.mrb[0].mxu0
      %v1663 = vpop.f32.mrb[0].mxu0
      %v1664 = vadd.f32 0.0, %v1663
      %v1665 = vpop.f32.mrb[0].mxu0
      %1666 = vdwg.mxu0
      %v1667 = vrcp.pop %v1380
      %v1668 = vrcp.pop %v1383
      %v1669 = vrcp.pop %v1386
      %v1670 = vrcp.pop %v1389
      %v1671 = vrcp.pop %v1392
      %v1672 = vrcp.pop %v1395
      %v1673 = vrcp.pop %v1398
      %v1674 = vrcp.pop %v1401
      %v1675 = vrcp.pop %v1404
      %v1676 = vrcp.pop %v1407
      %v1677 = vrcp.pop %v1410
      %v1678 = vrcp.pop %v1413
      %v1679 = vrcp.pop %v1416
      %v1680 = vrcp.pop %v1419
      %v1681 = vrcp.pop %v1422
      %v1682 = vrcp.pop %v1425
      %v1683 = vrcp.pop %v1428
      %v1684 = vrcp.pop %v1431
      %v1685 = vrcp.pop %v1434
      %v1686 = vrcp.pop %v1437
      %v1687 = vrcp.pop %v1440
      %v1688 = vrcp.pop %v1443
      %v1689 = vrcp.pop %v1446
      %v1690 = vrcp.pop %v1449
      %v1691 = vrcp.pop %v1452
      %v1692 = vrcp.pop %v1455
      %v1693 = vrcp.pop %v1458
      %v1694 = vrcp.pop %v1461
      %v1695 = vrcp.pop %v1464
      %v1696 = vrcp.pop %v1467
      %v1697 = vrcp.pop %v1470
      %v1698 = vrcp.pop %v1473
      %v1699 = vmul.f32 %v1541, %v1667
      %v1700 = vmul.f32 %v1544, %v1668
      %v1701 = vmul.f32 %v1549, %v1669
      %v1702 = vmul.f32 %v1552, %v1670
      %v1703 = vmul.f32 %v1557, %v1671
      %v1704 = vmul.f32 %v1560, %v1672
      %v1705 = vmul.f32 %v1565, %v1673
      %v1706 = vmul.f32 %v1568, %v1674
      %v1707 = vmul.f32 %v1573, %v1675
      %v1708 = vmul.f32 %v1576, %v1676
      %v1709 = vmul.f32 %v1581, %v1677
      %v1710 = vmul.f32 %v1584, %v1678
      %v1711 = vmul.f32 %v1589, %v1679
      %v1712 = vmul.f32 %v1592, %v1680
      %v1713 = vmul.f32 %v1597, %v1681
      %v1714 = vmul.f32 %v1600, %v1682
      %v1715 = vmul.f32 %v1605, %v1683
      %v1716 = vmul.f32 %v1608, %v1684
      %v1717 = vmul.f32 %v1613, %v1685
      %v1718 = vmul.f32 %v1616, %v1686
      %v1719 = vmul.f32 %v1621, %v1687
      %v1720 = vmul.f32 %v1624, %v1688
      %v1721 = vmul.f32 %v1629, %v1689
      %v1722 = vmul.f32 %v1632, %v1690
      %v1723 = vmul.f32 %v1637, %v1691
      %v1724 = vmul.f32 %v1640, %v1692
      %v1725 = vmul.f32 %v1645, %v1693
      %v1726 = vmul.f32 %v1648, %v1694
      %v1727 = vmul.f32 %v1653, %v1695
      %v1728 = vmul.f32 %v1656, %v1696
      %v1729 = vmul.f32 %v1661, %v1697
      %v1730 = vmul.f32 %v1664, %v1698
      %1731 = vxpose.xlu0.b32.start [1/16] %v1699, 128
      %1732 = vxpose.xlu0.b32.cont [2/16] %v1700, 128
      %1733 = vxpose.xlu0.b32.cont [3/16] %v1701, 128
      %1734 = vxpose.xlu0.b32.cont [4/16] %v1702, 128
      %1735 = vxpose.xlu0.b32.cont [5/16] %v1703, 128
      %1736 = vxpose.xlu0.b32.cont [6/16] %v1704, 128
      %1737 = vxpose.xlu0.b32.cont [7/16] %v1705, 128
      %1738 = vxpose.xlu0.b32.cont [8/16] %v1706, 128
      %1739 = vxpose.xlu0.b32.cont [9/16] %v1707, 128
      %1740 = vxpose.xlu0.b32.cont [10/16] %v1708, 128
      %1741 = vxpose.xlu0.b32.cont [11/16] %v1709, 128
      %1742 = vxpose.xlu0.b32.cont [12/16] %v1710, 128
      %1743 = vxpose.xlu0.b32.cont [13/16] %v1711, 128
      %1744 = vxpose.xlu0.b32.cont [14/16] %v1712, 128
      %1745 = vxpose.xlu0.b32.cont [15/16] %v1713, 128
      %1746 = vxpose.xlu0.b32.end [16/16] %v1714, 128
      %v1747 = vpop.trf.xlu0
      %v1748 = vpop.trf.xlu0
      %v1749 = vpop.trf.xlu0
      %v1750 = vpop.trf.xlu0
      %v1751 = vpop.trf.xlu0
      %v1752 = vpop.trf.xlu0
      %v1753 = vpop.trf.xlu0
      %v1754 = vpop.trf.xlu0
      %v1755 = vpop.trf.xlu0
      %v1756 = vpop.trf.xlu0
      %v1757 = vpop.trf.xlu0
      %v1758 = vpop.trf.xlu0
      %v1759 = vpop.trf.xlu0
      %v1760 = vpop.trf.xlu0
      %v1761 = vpop.trf.xlu0
      %v1762 = vpop.trf.xlu0
      %1763 = vxpose.xlu0.b32.start [1/16] %v1715, 128
      %1764 = vxpose.xlu0.b32.cont [2/16] %v1716, 128
      %1765 = vxpose.xlu0.b32.cont [3/16] %v1717, 128
      %1766 = vxpose.xlu0.b32.cont [4/16] %v1718, 128
      %1767 = vxpose.xlu0.b32.cont [5/16] %v1719, 128
      %1768 = vxpose.xlu0.b32.cont [6/16] %v1720, 128
      %1769 = vxpose.xlu0.b32.cont [7/16] %v1721, 128
      %1770 = vxpose.xlu0.b32.cont [8/16] %v1722, 128
      %1771 = vxpose.xlu0.b32.cont [9/16] %v1723, 128
      %1772 = vxpose.xlu0.b32.cont [10/16] %v1724, 128
      %1773 = vxpose.xlu0.b32.cont [11/16] %v1725, 128
      %1774 = vxpose.xlu0.b32.cont [12/16] %v1726, 128
      %1775 = vxpose.xlu0.b32.cont [13/16] %v1727, 128
      %1776 = vxpose.xlu0.b32.cont [14/16] %v1728, 128
      %1777 = vxpose.xlu0.b32.cont [15/16] %v1729, 128
      %1778 = vxpose.xlu0.b32.end [16/16] %v1730, 128
      %v1779 = vpop.trf.xlu0
      %v1780 = vpop.trf.xlu0
      %v1781 = vpop.trf.xlu0
      %v1782 = vpop.trf.xlu0
      %v1783 = vpop.trf.xlu0
      %v1784 = vpop.trf.xlu0
      %v1785 = vpop.trf.xlu0
      %v1786 = vpop.trf.xlu0
      %v1787 = vpop.trf.xlu0
      %v1788 = vpop.trf.xlu0
      %v1789 = vpop.trf.xlu0
      %v1790 = vpop.trf.xlu0
      %v1791 = vpop.trf.xlu0
      %v1792 = vpop.trf.xlu0
      %v1793 = vpop.trf.xlu0
      %v1794 = vpop.trf.xlu0
      %s1795 = sshra.s32 %s843, 7
      %s1796 = sand.u32 %s843, 127
      %s1797 = smul.addr %s1795, 8
      %s1798 = scalar_lea.vmem %s183, %s1797
      %v1799 = vld [vmem:[%s1798] sm:$0xff]
      %v1800 = vld [vmem:[%s1798 + $0x8] sm:$0xff]
      %v1801 = vld [vmem:[%s1798 + $0x10] sm:$0xff]
      %v1802 = vld [vmem:[%s1798 + $0x18] sm:$0xff]
      %v1803 = vld [vmem:[%s1798 + $0x20] sm:$0xff]
      %v1804 = vld [vmem:[%s1798 + $0x28] sm:$0xff]
      %v1805 = vld [vmem:[%s1798 + $0x30] sm:$0xff]
      %v1806 = vld [vmem:[%s1798 + $0x38] sm:$0xff]
      %v1807 = vadd.f32 %v1747, %v1799
      %v1808 = vadd.f32 %v1779, %v1800
      %v1809 = vadd.f32 %v1748, %v1801
      %v1810 = vadd.f32 %v1780, %v1802
      %v1811 = vadd.f32 %v1749, %v1803
      %v1812 = vadd.f32 %v1781, %v1804
      %v1813 = vadd.f32 %v1750, %v1805
      %v1814 = vadd.f32 %v1782, %v1806
      %1815 = vst [vmem:[%s192] sm:$0xff] %v1807
      %1816 = vst [vmem:[%s192 + $0x8] sm:$0xff] %v1808
      %1817 = vst [vmem:[%s192 + $0x10] sm:$0xff] %v1809
      %1818 = vst [vmem:[%s192 + $0x18] sm:$0xff] %v1810
      %1819 = vst [vmem:[%s192 + $0x20] sm:$0xff] %v1811
      %1820 = vst [vmem:[%s192 + $0x28] sm:$0xff] %v1812
      %1821 = vst [vmem:[%s192 + $0x30] sm:$0xff] %v1813
      %1822 = vst [vmem:[%s192 + $0x38] sm:$0xff] %v1814
      %s1823 = smul.u32 2, %s19
      %p1824 = scmp.lt.s32.totalorder %s18, 1
      %s1825 = scalar_select %p1824, %s18, 1
      %p1826 = scmp.lt.s32.totalorder %s1823, 1
      %s1827 = scalar_select %p1826, %s1823, 1
      %s1828 = smul.addr %s1825, 8
      %s1829 = sadd.s32 %s1827, %s1828
      %s1830 = smul.addr %s1829, 8
      %s1831 = scalar_lea.vmem %s3, %s1830
      // Predicated region
      $region37: #{self_attention.1} parent=31 // pred_check
        %p1832 = pneg %p114
      $region38: #{self_attention.1} parent=31 // pred_check_branch
        %1834 = sbr.rel (%p1832) target = $region40
      $region39: #{self_attention.1} parent=31 // pred_region
        %s1835 = smul.u32 2, %s19
      $region40: #{self_attention.1} parent=31 // pred_fallthru
        _
    $region32: #{self_attention.1} parent=5 // pred_fallthru
      _
    %p1836 = scmp.le.s32.totalorder 2, %s9
    // Predicated region
    $region41: #{self_attention.1} parent=5 // pred_check
      %p1837 = pneg %p1836
    $region42: #{self_attention.1} parent=5 // pred_check_branch
      %1839 = sbr.rel (%p1837) target = $region44
    $region43: #{self_attention.1} parent=5 // pred_region
      %s1840 = ssub.s32 %s9, 2
      // Predicated region
      $region45: #{self_attention.1} parent=43 // pred_check
        %p1841 = pneg %p120
      $region46: #{self_attention.1} parent=43 // pred_check_branch
        %1843 = sbr.rel (%p1841) target = $region48
      $region47: #{self_attention.1} parent=43 // pred_region
        %s1844 = smul.u32 2, %s21
        %p1845 = scmp.lt.s32.totalorder %s20, 1
        %s1846 = scalar_select %p1845, %s20, 1
        %p1847 = scmp.lt.s32.totalorder %s1844, 1
        %s1848 = scalar_select %p1847, %s1844, 1
        %s1849 = smul.addr %s1846, 8
        %s1850 = sadd.s32 %s1848, %s1849
        %s1851 = smul.addr %s1850, 8
        %s1852 = scalar_lea.vmem %s3, %s1851
      $region48: #{self_attention.1} parent=43 // pred_fallthru
        _
    $region44: #{self_attention.1} parent=5 // pred_fallthru
      _
  $region6: #{self_attention.1} parent=0 // loop_footer
    %s13 = sadd.s32 1, %s9
  $region7: #{self_attention.1} parent=0 // loop_footer_branch
    %8 = sbr.rel target = $region3
  $region8: #{self_attention.1} parent=0 // loop_exit
    _

</llo_original>
